<compile_context>
chip_gen: v7x
topology: tpu7x:2x2x1
jax: 0.10.0
libtpu: 0.0.40
codegen_flags: <defaults>
</compile_context>

<pallas_src>
import functools

import jax
import jax.numpy as jnp
from jax.experimental import pallas as pl
from jax.experimental.pallas import tpu as pltpu

NUM_QUERIES = 1
NUM_KEYS = 1
NUM_VALUES = 1
NUM_HEADS = 8
SCALE_FACTOR = 1.0 / (NUM_HEADS ** 0.5)   # scale_factor / sqrt(num_heads)
DROPOUT_P = 0.0                           # p == 0.0 -> dropout is the identity


def _round_up(x, m):
    return (x + m - 1) // m * m


def _sdpa_kernel(q_ref, k_ref, w12_ref, v_ref, o_ref, *, num_heads, head_dv):
    # q_ref : (TN, 1)          k_ref : (TN, 1)
    # w12_ref: (2, H)  row 0 = w1 / scale_factor, row 1 = w2
    # v_ref : (TN, H*Dv)  lane-dense     o_ref : (TN, H*Dv)  lane-dense
    H, DV = num_heads, head_dv

    q = q_ref[...]                      # (TN, 1) f32
    k = k_ref[...]                      # (TN, 1) f32
    w1 = w12_ref[0:1, :]                # (1, H)  (already includes 1/scale_factor)
    w2 = w12_ref[1:2, :]                # (1, H)

    # Linear layers with in_features == 1 are rank-1 outer products -> pure VPU
    # broadcast multiplies (no MXU push/pop for a degenerate K=1 matmul).
    m1 = q * w1                         # (TN, H) == (query @ W1^T) / scale_factor
    m2 = k * w2                         # (TN, H) ==  key   @ W2^T

    v = v_ref[...]                      # (TN, H*DV) lane-dense

    # Because num_keys == num_values == 1, the per-row attention matrix is the
    # outer product qk[n, h, g] = m1[n, h] * m2[n, g].  Process one head h at a
    # time (static unroll of 8): 2-D intermediates only, softmax over g (8 wide),
    # then 8 broadcast FMAs against 16-lane slices of the lane-dense value tile.
    # dropout_p == 0.0 -> dropout is the identity (omitted).
    chunks = []
    for h in range(H):                  # static unroll: H = 8 heads
        s = m1[:, h:h + 1] * m2                               # (TN, H) scaled scores
        s = s - jnp.max(s, axis=-1, keepdims=True)
        e = jnp.exp(s)
        p = e * pl.reciprocal(jnp.sum(e, axis=-1, keepdims=True), approx=True)
        acc = p[:, 0:1] * v[:, 0:DV]                          # (TN, DV)
        for g in range(1, H):           # static unroll: H = 8 keys
            acc = acc + p[:, g:g + 1] * v[:, g * DV:(g + 1) * DV]
        chunks.append(acc)
    # One dense (TN, H*DV) store -> unmasked full-lane vst.
    o_ref[...] = jnp.concatenate(chunks, axis=-1).astype(o_ref.dtype)


def sdpa_pallas(query, key, value, w1, w2, *, scale_factor=SCALE_FACTOR,
                row_block=None):
    B, S, Q = query.shape
    _, _, H, Dv = value.shape
    Kf = key.shape[-1]

    # The rank-1 formulation inside the kernel is only valid for the degenerate
    # shapes of this module: num_queries == num_keys == num_values == 1.
    assert Q == 1 and Kf == 1, "kernel requires num_queries == num_keys == 1"
    assert w1.shape == (Q, H) and w2.shape == (Kf, H), (
        "kernel requires num_keys == num_values == 1 (weights of shape (1, H))")

    N = B * S
    if row_block is None:
        # Big row blocks (up to 512) but keep >= 2 grid steps when N allows, so
        # dimension_semantics=("parallel",) can use both v7x TensorCores.
        row_block = min(512, _round_up(pl.cdiv(N, 2), 8))
    n_pad = _round_up(N, row_block)

    q2 = query.reshape(N, Q).astype(jnp.float32)
    k2 = key.reshape(N, Kf).astype(jnp.float32)
    v2 = value.reshape(N, H * Dv).astype(jnp.float32)   # lane-dense (128 lanes here)
    if n_pad != N:
        q2 = jnp.pad(q2, ((0, n_pad - N), (0, 0)))
        k2 = jnp.pad(k2, ((0, n_pad - N), (0, 0)))
        v2 = jnp.pad(v2, ((0, n_pad - N), (0, 0)))

    # Fold 1/scale_factor into w1: (q @ (w1/s)) outer m2 == (q @ w1 outer m2)/s,
    # and pack both tiny weight vectors into a single (2, H) VMEM tile.
    w12 = jnp.concatenate(
        [w1.astype(jnp.float32) / scale_factor, w2.astype(jnp.float32)], axis=0)

    kern = functools.partial(_sdpa_kernel, num_heads=H, head_dv=Dv)
    grid = (n_pad // row_block,)
    cost = pl.CostEstimate(
        flops=int(n_pad * (4 * H + 3 * H * H + 2 * H * H * Dv)),
        transcendentals=int(n_pad * (H * H + H)),
        bytes_accessed=int(4 * (n_pad * (Q + Kf + 2 * H * Dv) + 2 * H)),
    )

    out = pl.pallas_call(
        kern,
        out_shape=jax.ShapeDtypeStruct((n_pad, H * Dv), jnp.float32),
        grid_spec=pltpu.PrefetchScalarGridSpec(
            num_scalar_prefetch=0,
            grid=grid,
            in_specs=[
                pl.BlockSpec((row_block, Q), lambda i: (i, 0)),
                pl.BlockSpec((row_block, Kf), lambda i: (i, 0)),
                pl.BlockSpec((2, H), lambda i: (0, 0)),
                pl.BlockSpec((row_block, H * Dv), lambda i: (i, 0)),
            ],
            out_specs=pl.BlockSpec((row_block, H * Dv), lambda i: (i, 0)),
        ),
        compiler_params=pltpu.CompilerParams(
            dimension_semantics=("parallel",)),
        cost_estimate=cost,
    )(q2, k2, w12, v2)
    return out[:N].reshape(B, S, H, Dv)


def sdpa_ref(query, key, value, w1, w2, scale_factor, num_heads, num_keys,
             num_values):
    # Pure-JAX reference mirroring the PyTorch forward exactly (explicit divide).
    m1 = query @ w1
    m2 = key @ w2
    qh = m1.reshape(m1.shape[:-1] + (num_heads, num_keys))
    kh = m2.reshape(m2.shape[:-1] + (num_heads, num_values))
    qk = jnp.matmul(qh, jnp.swapaxes(kh, -1, -2))
    scaled = qk / scale_factor
    sm = jax.nn.softmax(scaled, axis=-1)
    return jnp.matmul(sm, value)


if __name__ == "__main__":
    root = jax.random.PRNGKey(0)
    kq, kk, kv, kw1, kw2 = jax.random.split(root, 5)

    B, S, Dv = 2, 8, 16
    query = jax.random.normal(kq, (B, S, NUM_QUERIES), jnp.float32)
    key_t = jax.random.normal(kk, (B, S, NUM_KEYS), jnp.float32)
    value = jax.random.normal(kv, (B, S, NUM_HEADS, Dv), jnp.float32)

    # Deterministic Linear weights (stored pre-transposed: (in, out)),
    # init range mimics torch's default 1/sqrt(fan_in) uniform.
    b1 = 1.0 / (NUM_QUERIES ** 0.5)
    w1 = jax.random.uniform(kw1, (NUM_QUERIES, NUM_HEADS * NUM_KEYS),
                            jnp.float32, -b1, b1)
    b2 = 1.0 / (NUM_KEYS ** 0.5)
    w2 = jax.random.uniform(kw2, (NUM_KEYS, NUM_HEADS * NUM_VALUES),
                            jnp.float32, -b2, b2)

    out = sdpa_pallas(query, key_t, value, w1, w2)
    out = jax.block_until_ready(out)

    ref = sdpa_ref(query, key_t, value, w1, w2,
                   SCALE_FACTOR, NUM_HEADS, NUM_KEYS, NUM_VALUES)
    assert out.shape == (B, S, NUM_HEADS, Dv)
    # Tolerance accounts for the approximate (EUP) reciprocal in the softmax
    # normalization; the formula is otherwise identical to the reference.
    assert jnp.allclose(out, ref, atol=5e-3, rtol=5e-3), \
        "Pallas kernel mismatch vs reference"
    print("KERNEL_OK")
</pallas_src>

<mosaic_0001>
module attributes {stable_mosaic.version = 11 : i64} {
  func.func @_sdpa_kernel(%arg0: i32, %arg1: memref<8x1xf32, #tpu.memory_space<vmem>>, %arg2: memref<8x1xf32, #tpu.memory_space<vmem>>, %arg3: memref<2x8xf32, #tpu.memory_space<vmem>>, %arg4: memref<8x128xf32, #tpu.memory_space<vmem>>, %arg5: memref<8x128xf32, #tpu.memory_space<vmem>>) attributes {dimension_semantics = [#tpu.dimension_semantics<parallel>], iteration_bounds = array<i64: 2>, scalar_prefetch = 0 : i64, scratch_operands = 0 : i64, tpu.core_type = #tpu.core_type<tc>, window_params = [{transform_indices = @transform_0, window_bounds = array<i64: 8, 1>}, {transform_indices = @transform_1, window_bounds = array<i64: 8, 1>}, {pipeline_mode = #tpu.pipeline_mode<synchronous>, transform_indices = @transform_2, window_bounds = array<i64: 2, 8>}, {transform_indices = @transform_3, window_bounds = array<i64: 8, 128>}, {transform_indices = @transform_4, window_bounds = array<i64: 8, 128>}]} {
    %c0 = arith.constant 0 : index
    %c0_0 = arith.constant 0 : index
    %0 = vector.load %arg1[%c0, %c0_0] : memref<8x1xf32, #tpu.memory_space<vmem>>, vector<8x1xf32>
    %c0_1 = arith.constant 0 : index
    %c0_2 = arith.constant 0 : index
    %1 = vector.load %arg2[%c0_1, %c0_2] : memref<8x1xf32, #tpu.memory_space<vmem>>, vector<8x1xf32>
    %c0_3 = arith.constant 0 : index
    %c0_4 = arith.constant 0 : index
    %2 = vector.load %arg3[%c0_3, %c0_4] : memref<2x8xf32, #tpu.memory_space<vmem>>, vector<1x8xf32>
    %c1 = arith.constant 1 : index
    %c0_5 = arith.constant 0 : index
    %3 = vector.load %arg3[%c1, %c0_5] : memref<2x8xf32, #tpu.memory_space<vmem>>, vector<1x8xf32>
    %4 = vector.broadcast %0 : vector<8x1xf32> to vector<8x8xf32>
    %5 = vector.broadcast %2 : vector<1x8xf32> to vector<8x8xf32>
    %6 = arith.mulf %4, %5 : vector<8x8xf32>
    %7 = vector.broadcast %1 : vector<8x1xf32> to vector<8x8xf32>
    %8 = vector.broadcast %3 : vector<1x8xf32> to vector<8x8xf32>
    %9 = arith.mulf %7, %8 : vector<8x8xf32>
    %c0_6 = arith.constant 0 : index
    %c0_7 = arith.constant 0 : index
    %10 = vector.load %arg4[%c0_6, %c0_7] : memref<8x128xf32, #tpu.memory_space<vmem>>, vector<8x128xf32>
    %11 = vector.extract_strided_slice %6 {offsets = [0, 0], sizes = [8, 1], strides = [1, 1]} : vector<8x8xf32> to vector<8x1xf32>
    %12 = vector.broadcast %11 : vector<8x1xf32> to vector<8x8xf32>
    %13 = arith.mulf %12, %9 : vector<8x8xf32>
    %cst = arith.constant dense<0xFF800000> : vector<8xf32>
    %14 = vector.multi_reduction <maximumf>, %13, %cst [1] : vector<8x8xf32> to vector<8xf32>
    %15 = vector.shape_cast %14 : vector<8xf32> to vector<8x1xf32>
    %16 = vector.broadcast %15 : vector<8x1xf32> to vector<8x8xf32>
    %17 = arith.subf %13, %16 : vector<8x8xf32>
    %18 = math.exp %17 : vector<8x8xf32>
    %cst_8 = arith.constant dense<0.000000e+00> : vector<8xf32>
    %19 = vector.multi_reduction <add>, %18, %cst_8 [1] : vector<8x8xf32> to vector<8xf32>
    %20 = vector.shape_cast %19 : vector<8xf32> to vector<8x1xf32>
    %21 = tpu.reciprocal %20 {approx = true} : vector<8x1xf32> -> vector<8x1xf32>
    %22 = vector.broadcast %21 : vector<8x1xf32> to vector<8x8xf32>
    %23 = arith.mulf %18, %22 : vector<8x8xf32>
    %24 = vector.extract_strided_slice %23 {offsets = [0, 0], sizes = [8, 1], strides = [1, 1]} : vector<8x8xf32> to vector<8x1xf32>
    %25 = vector.extract_strided_slice %10 {offsets = [0, 0], sizes = [8, 16], strides = [1, 1]} : vector<8x128xf32> to vector<8x16xf32>
    %26 = vector.broadcast %24 : vector<8x1xf32> to vector<8x16xf32>
    %27 = arith.mulf %26, %25 : vector<8x16xf32>
    %28 = vector.extract_strided_slice %23 {offsets = [0, 1], sizes = [8, 1], strides = [1, 1]} : vector<8x8xf32> to vector<8x1xf32>
    %29 = vector.extract_strided_slice %10 {offsets = [0, 16], sizes = [8, 16], strides = [1, 1]} : vector<8x128xf32> to vector<8x16xf32>
    %30 = vector.broadcast %28 : vector<8x1xf32> to vector<8x16xf32>
    %31 = arith.mulf %30, %29 : vector<8x16xf32>
    %32 = arith.addf %27, %31 : vector<8x16xf32>
    %33 = vector.extract_strided_slice %23 {offsets = [0, 2], sizes = [8, 1], strides = [1, 1]} : vector<8x8xf32> to vector<8x1xf32>
    %34 = vector.extract_strided_slice %10 {offsets = [0, 32], sizes = [8, 16], strides = [1, 1]} : vector<8x128xf32> to vector<8x16xf32>
    %35 = vector.broadcast %33 : vector<8x1xf32> to vector<8x16xf32>
    %36 = arith.mulf %35, %34 : vector<8x16xf32>
    %37 = arith.addf %32, %36 : vector<8x16xf32>
    %38 = vector.extract_strided_slice %23 {offsets = [0, 3], sizes = [8, 1], strides = [1, 1]} : vector<8x8xf32> to vector<8x1xf32>
    %39 = vector.extract_strided_slice %10 {offsets = [0, 48], sizes = [8, 16], strides = [1, 1]} : vector<8x128xf32> to vector<8x16xf32>
    %40 = vector.broadcast %38 : vector<8x1xf32> to vector<8x16xf32>
    %41 = arith.mulf %40, %39 : vector<8x16xf32>
    %42 = arith.addf %37, %41 : vector<8x16xf32>
    %43 = vector.extract_strided_slice %23 {offsets = [0, 4], sizes = [8, 1], strides = [1, 1]} : vector<8x8xf32> to vector<8x1xf32>
    %44 = vector.extract_strided_slice %10 {offsets = [0, 64], sizes = [8, 16], strides = [1, 1]} : vector<8x128xf32> to vector<8x16xf32>
    %45 = vector.broadcast %43 : vector<8x1xf32> to vector<8x16xf32>
    %46 = arith.mulf %45, %44 : vector<8x16xf32>
    %47 = arith.addf %42, %46 : vector<8x16xf32>
    %48 = vector.extract_strided_slice %23 {offsets = [0, 5], sizes = [8, 1], strides = [1, 1]} : vector<8x8xf32> to vector<8x1xf32>
    %49 = vector.extract_strided_slice %10 {offsets = [0, 80], sizes = [8, 16], strides = [1, 1]} : vector<8x128xf32> to vector<8x16xf32>
    %50 = vector.broadcast %48 : vector<8x1xf32> to vector<8x16xf32>
    %51 = arith.mulf %50, %49 : vector<8x16xf32>
    %52 = arith.addf %47, %51 : vector<8x16xf32>
    %53 = vector.extract_strided_slice %23 {offsets = [0, 6], sizes = [8, 1], strides = [1, 1]} : vector<8x8xf32> to vector<8x1xf32>
    %54 = vector.extract_strided_slice %10 {offsets = [0, 96], sizes = [8, 16], strides = [1, 1]} : vector<8x128xf32> to vector<8x16xf32>
    %55 = vector.broadcast %53 : vector<8x1xf32> to vector<8x16xf32>
    %56 = arith.mulf %55, %54 : vector<8x16xf32>
    %57 = arith.addf %52, %56 : vector<8x16xf32>
    %58 = vector.extract_strided_slice %23 {offsets = [0, 7], sizes = [8, 1], strides = [1, 1]} : vector<8x8xf32> to vector<8x1xf32>
    %59 = vector.extract_strided_slice %10 {offsets = [0, 112], sizes = [8, 16], strides = [1, 1]} : vector<8x128xf32> to vector<8x16xf32>
    %60 = vector.broadcast %58 : vector<8x1xf32> to vector<8x16xf32>
    %61 = arith.mulf %60, %59 : vector<8x16xf32>
    %62 = arith.addf %57, %61 : vector<8x16xf32>
    %63 = vector.extract_strided_slice %6 {offsets = [0, 1], sizes = [8, 1], strides = [1, 1]} : vector<8x8xf32> to vector<8x1xf32>
    %64 = vector.broadcast %63 : vector<8x1xf32> to vector<8x8xf32>
    %65 = arith.mulf %64, %9 : vector<8x8xf32>
    %cst_9 = arith.constant dense<0xFF800000> : vector<8xf32>
    %66 = vector.multi_reduction <maximumf>, %65, %cst_9 [1] : vector<8x8xf32> to vector<8xf32>
    %67 = vector.shape_cast %66 : vector<8xf32> to vector<8x1xf32>
    %68 = vector.broadcast %67 : vector<8x1xf32> to vector<8x8xf32>
    %69 = arith.subf %65, %68 : vector<8x8xf32>
    %70 = math.exp %69 : vector<8x8xf32>
    %cst_10 = arith.constant dense<0.000000e+00> : vector<8xf32>
    %71 = vector.multi_reduction <add>, %70, %cst_10 [1] : vector<8x8xf32> to vector<8xf32>
    %72 = vector.shape_cast %71 : vector<8xf32> to vector<8x1xf32>
    %73 = tpu.reciprocal %72 {approx = true} : vector<8x1xf32> -> vector<8x1xf32>
    %74 = vector.broadcast %73 : vector<8x1xf32> to vector<8x8xf32>
    %75 = arith.mulf %70, %74 : vector<8x8xf32>
    %76 = vector.extract_strided_slice %75 {offsets = [0, 0], sizes = [8, 1], strides = [1, 1]} : vector<8x8xf32> to vector<8x1xf32>
    %77 = vector.extract_strided_slice %10 {offsets = [0, 0], sizes = [8, 16], strides = [1, 1]} : vector<8x128xf32> to vector<8x16xf32>
    %78 = vector.broadcast %76 : vector<8x1xf32> to vector<8x16xf32>
    %79 = arith.mulf %78, %77 : vector<8x16xf32>
    %80 = vector.extract_strided_slice %75 {offsets = [0, 1], sizes = [8, 1], strides = [1, 1]} : vector<8x8xf32> to vector<8x1xf32>
    %81 = vector.extract_strided_slice %10 {offsets = [0, 16], sizes = [8, 16], strides = [1, 1]} : vector<8x128xf32> to vector<8x16xf32>
    %82 = vector.broadcast %80 : vector<8x1xf32> to vector<8x16xf32>
    %83 = arith.mulf %82, %81 : vector<8x16xf32>
    %84 = arith.addf %79, %83 : vector<8x16xf32>
    %85 = vector.extract_strided_slice %75 {offsets = [0, 2], sizes = [8, 1], strides = [1, 1]} : vector<8x8xf32> to vector<8x1xf32>
    %86 = vector.extract_strided_slice %10 {offsets = [0, 32], sizes = [8, 16], strides = [1, 1]} : vector<8x128xf32> to vector<8x16xf32>
    %87 = vector.broadcast %85 : vector<8x1xf32> to vector<8x16xf32>
    %88 = arith.mulf %87, %86 : vector<8x16xf32>
    %89 = arith.addf %84, %88 : vector<8x16xf32>
    %90 = vector.extract_strided_slice %75 {offsets = [0, 3], sizes = [8, 1], strides = [1, 1]} : vector<8x8xf32> to vector<8x1xf32>
    %91 = vector.extract_strided_slice %10 {offsets = [0, 48], sizes = [8, 16], strides = [1, 1]} : vector<8x128xf32> to vector<8x16xf32>
    %92 = vector.broadcast %90 : vector<8x1xf32> to vector<8x16xf32>
    %93 = arith.mulf %92, %91 : vector<8x16xf32>
    %94 = arith.addf %89, %93 : vector<8x16xf32>
    %95 = vector.extract_strided_slice %75 {offsets = [0, 4], sizes = [8, 1], strides = [1, 1]} : vector<8x8xf32> to vector<8x1xf32>
    %96 = vector.extract_strided_slice %10 {offsets = [0, 64], sizes = [8, 16], strides = [1, 1]} : vector<8x128xf32> to vector<8x16xf32>
    %97 = vector.broadcast %95 : vector<8x1xf32> to vector<8x16xf32>
    %98 = arith.mulf %97, %96 : vector<8x16xf32>
    %99 = arith.addf %94, %98 : vector<8x16xf32>
    %100 = vector.extract_strided_slice %75 {offsets = [0, 5], sizes = [8, 1], strides = [1, 1]} : vector<8x8xf32> to vector<8x1xf32>
    %101 = vector.extract_strided_slice %10 {offsets = [0, 80], sizes = [8, 16], strides = [1, 1]} : vector<8x128xf32> to vector<8x16xf32>
    %102 = vector.broadcast %100 : vector<8x1xf32> to vector<8x16xf32>
    %103 = arith.mulf %102, %101 : vector<8x16xf32>
    %104 = arith.addf %99, %103 : vector<8x16xf32>
    %105 = vector.extract_strided_slice %75 {offsets = [0, 6], sizes = [8, 1], strides = [1, 1]} : vector<8x8xf32> to vector<8x1xf32>
    %106 = vector.extract_strided_slice %10 {offsets = [0, 96], sizes = [8, 16], strides = [1, 1]} : vector<8x128xf32> to vector<8x16xf32>
    %107 = vector.broadcast %105 : vector<8x1xf32> to vector<8x16xf32>
    %108 = arith.mulf %107, %106 : vector<8x16xf32>
    %109 = arith.addf %104, %108 : vector<8x16xf32>
    %110 = vector.extract_strided_slice %75 {offsets = [0, 7], sizes = [8, 1], strides = [1, 1]} : vector<8x8xf32> to vector<8x1xf32>
    %111 = vector.extract_strided_slice %10 {offsets = [0, 112], sizes = [8, 16], strides = [1, 1]} : vector<8x128xf32> to vector<8x16xf32>
    %112 = vector.broadcast %110 : vector<8x1xf32> to vector<8x16xf32>
    %113 = arith.mulf %112, %111 : vector<8x16xf32>
    %114 = arith.addf %109, %113 : vector<8x16xf32>
    %115 = vector.extract_strided_slice %6 {offsets = [0, 2], sizes = [8, 1], strides = [1, 1]} : vector<8x8xf32> to vector<8x1xf32>
    %116 = vector.broadcast %115 : vector<8x1xf32> to vector<8x8xf32>
    %117 = arith.mulf %116, %9 : vector<8x8xf32>
    %cst_11 = arith.constant dense<0xFF800000> : vector<8xf32>
    %118 = vector.multi_reduction <maximumf>, %117, %cst_11 [1] : vector<8x8xf32> to vector<8xf32>
    %119 = vector.shape_cast %118 : vector<8xf32> to vector<8x1xf32>
    %120 = vector.broadcast %119 : vector<8x1xf32> to vector<8x8xf32>
    %121 = arith.subf %117, %120 : vector<8x8xf32>
    %122 = math.exp %121 : vector<8x8xf32>
    %cst_12 = arith.constant dense<0.000000e+00> : vector<8xf32>
    %123 = vector.multi_reduction <add>, %122, %cst_12 [1] : vector<8x8xf32> to vector<8xf32>
    %124 = vector.shape_cast %123 : vector<8xf32> to vector<8x1xf32>
    %125 = tpu.reciprocal %124 {approx = true} : vector<8x1xf32> -> vector<8x1xf32>
    %126 = vector.broadcast %125 : vector<8x1xf32> to vector<8x8xf32>
    %127 = arith.mulf %122, %126 : vector<8x8xf32>
    %128 = vector.extract_strided_slice %127 {offsets = [0, 0], sizes = [8, 1], strides = [1, 1]} : vector<8x8xf32> to vector<8x1xf32>
    %129 = vector.extract_strided_slice %10 {offsets = [0, 0], sizes = [8, 16], strides = [1, 1]} : vector<8x128xf32> to vector<8x16xf32>
    %130 = vector.broadcast %128 : vector<8x1xf32> to vector<8x16xf32>
    %131 = arith.mulf %130, %129 : vector<8x16xf32>
    %132 = vector.extract_strided_slice %127 {offsets = [0, 1], sizes = [8, 1], strides = [1, 1]} : vector<8x8xf32> to vector<8x1xf32>
    %133 = vector.extract_strided_slice %10 {offsets = [0, 16], sizes = [8, 16], strides = [1, 1]} : vector<8x128xf32> to vector<8x16xf32>
    %134 = vector.broadcast %132 : vector<8x1xf32> to vector<8x16xf32>
    %135 = arith.mulf %134, %133 : vector<8x16xf32>
    %136 = arith.addf %131, %135 : vector<8x16xf32>
    %137 = vector.extract_strided_slice %127 {offsets = [0, 2], sizes = [8, 1], strides = [1, 1]} : vector<8x8xf32> to vector<8x1xf32>
    %138 = vector.extract_strided_slice %10 {offsets = [0, 32], sizes = [8, 16], strides = [1, 1]} : vector<8x128xf32> to vector<8x16xf32>
    %139 = vector.broadcast %137 : vector<8x1xf32> to vector<8x16xf32>
    %140 = arith.mulf %139, %138 : vector<8x16xf32>
    %141 = arith.addf %136, %140 : vector<8x16xf32>
    %142 = vector.extract_strided_slice %127 {offsets = [0, 3], sizes = [8, 1], strides = [1, 1]} : vector<8x8xf32> to vector<8x1xf32>
    %143 = vector.extract_strided_slice %10 {offsets = [0, 48], sizes = [8, 16], strides = [1, 1]} : vector<8x128xf32> to vector<8x16xf32>
    %144 = vector.broadcast %142 : vector<8x1xf32> to vector<8x16xf32>
    %145 = arith.mulf %144, %143 : vector<8x16xf32>
    %146 = arith.addf %141, %145 : vector<8x16xf32>
    %147 = vector.extract_strided_slice %127 {offsets = [0, 4], sizes = [8, 1], strides = [1, 1]} : vector<8x8xf32> to vector<8x1xf32>
    %148 = vector.extract_strided_slice %10 {offsets = [0, 64], sizes = [8, 16], strides = [1, 1]} : vector<8x128xf32> to vector<8x16xf32>
    %149 = vector.broadcast %147 : vector<8x1xf32> to vector<8x16xf32>
    %150 = arith.mulf %149, %148 : vector<8x16xf32>
    %151 = arith.addf %146, %150 : vector<8x16xf32>
    %152 = vector.extract_strided_slice %127 {offsets = [0, 5], sizes = [8, 1], strides = [1, 1]} : vector<8x8xf32> to vector<8x1xf32>
    %153 = vector.extract_strided_slice %10 {offsets = [0, 80], sizes = [8, 16], strides = [1, 1]} : vector<8x128xf32> to vector<8x16xf32>
    %154 = vector.broadcast %152 : vector<8x1xf32> to vector<8x16xf32>
    %155 = arith.mulf %154, %153 : vector<8x16xf32>
    %156 = arith.addf %151, %155 : vector<8x16xf32>
    %157 = vector.extract_strided_slice %127 {offsets = [0, 6], sizes = [8, 1], strides = [1, 1]} : vector<8x8xf32> to vector<8x1xf32>
    %158 = vector.extract_strided_slice %10 {offsets = [0, 96], sizes = [8, 16], strides = [1, 1]} : vector<8x128xf32> to vector<8x16xf32>
    %159 = vector.broadcast %157 : vector<8x1xf32> to vector<8x16xf32>
    %160 = arith.mulf %159, %158 : vector<8x16xf32>
    %161 = arith.addf %156, %160 : vector<8x16xf32>
    %162 = vector.extract_strided_slice %127 {offsets = [0, 7], sizes = [8, 1], strides = [1, 1]} : vector<8x8xf32> to vector<8x1xf32>
    %163 = vector.extract_strided_slice %10 {offsets = [0, 112], sizes = [8, 16], strides = [1, 1]} : vector<8x128xf32> to vector<8x16xf32>
    %164 = vector.broadcast %162 : vector<8x1xf32> to vector<8x16xf32>
    %165 = arith.mulf %164, %163 : vector<8x16xf32>
    %166 = arith.addf %161, %165 : vector<8x16xf32>
    %167 = vector.extract_strided_slice %6 {offsets = [0, 3], sizes = [8, 1], strides = [1, 1]} : vector<8x8xf32> to vector<8x1xf32>
    %168 = vector.broadcast %167 : vector<8x1xf32> to vector<8x8xf32>
    %169 = arith.mulf %168, %9 : vector<8x8xf32>
    %cst_13 = arith.constant dense<0xFF800000> : vector<8xf32>
    %170 = vector.multi_reduction <maximumf>, %169, %cst_13 [1] : vector<8x8xf32> to vector<8xf32>
    %171 = vector.shape_cast %170 : vector<8xf32> to vector<8x1xf32>
    %172 = vector.broadcast %171 : vector<8x1xf32> to vector<8x8xf32>
    %173 = arith.subf %169, %172 : vector<8x8xf32>
    %174 = math.exp %173 : vector<8x8xf32>
    %cst_14 = arith.constant dense<0.000000e+00> : vector<8xf32>
    %175 = vector.multi_reduction <add>, %174, %cst_14 [1] : vector<8x8xf32> to vector<8xf32>
    %176 = vector.shape_cast %175 : vector<8xf32> to vector<8x1xf32>
    %177 = tpu.reciprocal %176 {approx = true} : vector<8x1xf32> -> vector<8x1xf32>
    %178 = vector.broadcast %177 : vector<8x1xf32> to vector<8x8xf32>
    %179 = arith.mulf %174, %178 : vector<8x8xf32>
    %180 = vector.extract_strided_slice %179 {offsets = [0, 0], sizes = [8, 1], strides = [1, 1]} : vector<8x8xf32> to vector<8x1xf32>
    %181 = vector.extract_strided_slice %10 {offsets = [0, 0], sizes = [8, 16], strides = [1, 1]} : vector<8x128xf32> to vector<8x16xf32>
    %182 = vector.broadcast %180 : vector<8x1xf32> to vector<8x16xf32>
    %183 = arith.mulf %182, %181 : vector<8x16xf32>
    %184 = vector.extract_strided_slice %179 {offsets = [0, 1], sizes = [8, 1], strides = [1, 1]} : vector<8x8xf32> to vector<8x1xf32>
    %185 = vector.extract_strided_slice %10 {offsets = [0, 16], sizes = [8, 16], strides = [1, 1]} : vector<8x128xf32> to vector<8x16xf32>
    %186 = vector.broadcast %184 : vector<8x1xf32> to vector<8x16xf32>
    %187 = arith.mulf %186, %185 : vector<8x16xf32>
    %188 = arith.addf %183, %187 : vector<8x16xf32>
    %189 = vector.extract_strided_slice %179 {offsets = [0, 2], sizes = [8, 1], strides = [1, 1]} : vector<8x8xf32> to vector<8x1xf32>
    %190 = vector.extract_strided_slice %10 {offsets = [0, 32], sizes = [8, 16], strides = [1, 1]} : vector<8x128xf32> to vector<8x16xf32>
    %191 = vector.broadcast %189 : vector<8x1xf32> to vector<8x16xf32>
    %192 = arith.mulf %191, %190 : vector<8x16xf32>
    %193 = arith.addf %188, %192 : vector<8x16xf32>
    %194 = vector.extract_strided_slice %179 {offsets = [0, 3], sizes = [8, 1], strides = [1, 1]} : vector<8x8xf32> to vector<8x1xf32>
    %195 = vector.extract_strided_slice %10 {offsets = [0, 48], sizes = [8, 16], strides = [1, 1]} : vector<8x128xf32> to vector<8x16xf32>
    %196 = vector.broadcast %194 : vector<8x1xf32> to vector<8x16xf32>
    %197 = arith.mulf %196, %195 : vector<8x16xf32>
    %198 = arith.addf %193, %197 : vector<8x16xf32>
    %199 = vector.extract_strided_slice %179 {offsets = [0, 4], sizes = [8, 1], strides = [1, 1]} : vector<8x8xf32> to vector<8x1xf32>
    %200 = vector.extract_strided_slice %10 {offsets = [0, 64], sizes = [8, 16], strides = [1, 1]} : vector<8x128xf32> to vector<8x16xf32>
    %201 = vector.broadcast %199 : vector<8x1xf32> to vector<8x16xf32>
    %202 = arith.mulf %201, %200 : vector<8x16xf32>
    %203 = arith.addf %198, %202 : vector<8x16xf32>
    %204 = vector.extract_strided_slice %179 {offsets = [0, 5], sizes = [8, 1], strides = [1, 1]} : vector<8x8xf32> to vector<8x1xf32>
    %205 = vector.extract_strided_slice %10 {offsets = [0, 80], sizes = [8, 16], strides = [1, 1]} : vector<8x128xf32> to vector<8x16xf32>
    %206 = vector.broadcast %204 : vector<8x1xf32> to vector<8x16xf32>
    %207 = arith.mulf %206, %205 : vector<8x16xf32>
    %208 = arith.addf %203, %207 : vector<8x16xf32>
    %209 = vector.extract_strided_slice %179 {offsets = [0, 6], sizes = [8, 1], strides = [1, 1]} : vector<8x8xf32> to vector<8x1xf32>
    %210 = vector.extract_strided_slice %10 {offsets = [0, 96], sizes = [8, 16], strides = [1, 1]} : vector<8x128xf32> to vector<8x16xf32>
    %211 = vector.broadcast %209 : vector<8x1xf32> to vector<8x16xf32>
    %212 = arith.mulf %211, %210 : vector<8x16xf32>
    %213 = arith.addf %208, %212 : vector<8x16xf32>
    %214 = vector.extract_strided_slice %179 {offsets = [0, 7], sizes = [8, 1], strides = [1, 1]} : vector<8x8xf32> to vector<8x1xf32>
    %215 = vector.extract_strided_slice %10 {offsets = [0, 112], sizes = [8, 16], strides = [1, 1]} : vector<8x128xf32> to vector<8x16xf32>
    %216 = vector.broadcast %214 : vector<8x1xf32> to vector<8x16xf32>
    %217 = arith.mulf %216, %215 : vector<8x16xf32>
    %218 = arith.addf %213, %217 : vector<8x16xf32>
    %219 = vector.extract_strided_slice %6 {offsets = [0, 4], sizes = [8, 1], strides = [1, 1]} : vector<8x8xf32> to vector<8x1xf32>
    %220 = vector.broadcast %219 : vector<8x1xf32> to vector<8x8xf32>
    %221 = arith.mulf %220, %9 : vector<8x8xf32>
    %cst_15 = arith.constant dense<0xFF800000> : vector<8xf32>
    %222 = vector.multi_reduction <maximumf>, %221, %cst_15 [1] : vector<8x8xf32> to vector<8xf32>
    %223 = vector.shape_cast %222 : vector<8xf32> to vector<8x1xf32>
    %224 = vector.broadcast %223 : vector<8x1xf32> to vector<8x8xf32>
    %225 = arith.subf %221, %224 : vector<8x8xf32>
    %226 = math.exp %225 : vector<8x8xf32>
    %cst_16 = arith.constant dense<0.000000e+00> : vector<8xf32>
    %227 = vector.multi_reduction <add>, %226, %cst_16 [1] : vector<8x8xf32> to vector<8xf32>
    %228 = vector.shape_cast %227 : vector<8xf32> to vector<8x1xf32>
    %229 = tpu.reciprocal %228 {approx = true} : vector<8x1xf32> -> vector<8x1xf32>
    %230 = vector.broadcast %229 : vector<8x1xf32> to vector<8x8xf32>
    %231 = arith.mulf %226, %230 : vector<8x8xf32>
    %232 = vector.extract_strided_slice %231 {offsets = [0, 0], sizes = [8, 1], strides = [1, 1]} : vector<8x8xf32> to vector<8x1xf32>
    %233 = vector.extract_strided_slice %10 {offsets = [0, 0], sizes = [8, 16], strides = [1, 1]} : vector<8x128xf32> to vector<8x16xf32>
    %234 = vector.broadcast %232 : vector<8x1xf32> to vector<8x16xf32>
    %235 = arith.mulf %234, %233 : vector<8x16xf32>
    %236 = vector.extract_strided_slice %231 {offsets = [0, 1], sizes = [8, 1], strides = [1, 1]} : vector<8x8xf32> to vector<8x1xf32>
    %237 = vector.extract_strided_slice %10 {offsets = [0, 16], sizes = [8, 16], strides = [1, 1]} : vector<8x128xf32> to vector<8x16xf32>
    %238 = vector.broadcast %236 : vector<8x1xf32> to vector<8x16xf32>
    %239 = arith.mulf %238, %237 : vector<8x16xf32>
    %240 = arith.addf %235, %239 : vector<8x16xf32>
    %241 = vector.extract_strided_slice %231 {offsets = [0, 2], sizes = [8, 1], strides = [1, 1]} : vector<8x8xf32> to vector<8x1xf32>
    %242 = vector.extract_strided_slice %10 {offsets = [0, 32], sizes = [8, 16], strides = [1, 1]} : vector<8x128xf32> to vector<8x16xf32>
    %243 = vector.broadcast %241 : vector<8x1xf32> to vector<8x16xf32>
    %244 = arith.mulf %243, %242 : vector<8x16xf32>
    %245 = arith.addf %240, %244 : vector<8x16xf32>
    %246 = vector.extract_strided_slice %231 {offsets = [0, 3], sizes = [8, 1], strides = [1, 1]} : vector<8x8xf32> to vector<8x1xf32>
    %247 = vector.extract_strided_slice %10 {offsets = [0, 48], sizes = [8, 16], strides = [1, 1]} : vector<8x128xf32> to vector<8x16xf32>
    %248 = vector.broadcast %246 : vector<8x1xf32> to vector<8x16xf32>
    %249 = arith.mulf %248, %247 : vector<8x16xf32>
    %250 = arith.addf %245, %249 : vector<8x16xf32>
    %251 = vector.extract_strided_slice %231 {offsets = [0, 4], sizes = [8, 1], strides = [1, 1]} : vector<8x8xf32> to vector<8x1xf32>
    %252 = vector.extract_strided_slice %10 {offsets = [0, 64], sizes = [8, 16], strides = [1, 1]} : vector<8x128xf32> to vector<8x16xf32>
    %253 = vector.broadcast %251 : vector<8x1xf32> to vector<8x16xf32>
    %254 = arith.mulf %253, %252 : vector<8x16xf32>
    %255 = arith.addf %250, %254 : vector<8x16xf32>
    %256 = vector.extract_strided_slice %231 {offsets = [0, 5], sizes = [8, 1], strides = [1, 1]} : vector<8x8xf32> to vector<8x1xf32>
    %257 = vector.extract_strided_slice %10 {offsets = [0, 80], sizes = [8, 16], strides = [1, 1]} : vector<8x128xf32> to vector<8x16xf32>
    %258 = vector.broadcast %256 : vector<8x1xf32> to vector<8x16xf32>
    %259 = arith.mulf %258, %257 : vector<8x16xf32>
    %260 = arith.addf %255, %259 : vector<8x16xf32>
    %261 = vector.extract_strided_slice %231 {offsets = [0, 6], sizes = [8, 1], strides = [1, 1]} : vector<8x8xf32> to vector<8x1xf32>
    %262 = vector.extract_strided_slice %10 {offsets = [0, 96], sizes = [8, 16], strides = [1, 1]} : vector<8x128xf32> to vector<8x16xf32>
    %263 = vector.broadcast %261 : vector<8x1xf32> to vector<8x16xf32>
    %264 = arith.mulf %263, %262 : vector<8x16xf32>
    %265 = arith.addf %260, %264 : vector<8x16xf32>
    %266 = vector.extract_strided_slice %231 {offsets = [0, 7], sizes = [8, 1], strides = [1, 1]} : vector<8x8xf32> to vector<8x1xf32>
    %267 = vector.extract_strided_slice %10 {offsets = [0, 112], sizes = [8, 16], strides = [1, 1]} : vector<8x128xf32> to vector<8x16xf32>
    %268 = vector.broadcast %266 : vector<8x1xf32> to vector<8x16xf32>
    %269 = arith.mulf %268, %267 : vector<8x16xf32>
    %270 = arith.addf %265, %269 : vector<8x16xf32>
    %271 = vector.extract_strided_slice %6 {offsets = [0, 5], sizes = [8, 1], strides = [1, 1]} : vector<8x8xf32> to vector<8x1xf32>
    %272 = vector.broadcast %271 : vector<8x1xf32> to vector<8x8xf32>
    %273 = arith.mulf %272, %9 : vector<8x8xf32>
    %cst_17 = arith.constant dense<0xFF800000> : vector<8xf32>
    %274 = vector.multi_reduction <maximumf>, %273, %cst_17 [1] : vector<8x8xf32> to vector<8xf32>
    %275 = vector.shape_cast %274 : vector<8xf32> to vector<8x1xf32>
    %276 = vector.broadcast %275 : vector<8x1xf32> to vector<8x8xf32>
    %277 = arith.subf %273, %276 : vector<8x8xf32>
    %278 = math.exp %277 : vector<8x8xf32>
    %cst_18 = arith.constant dense<0.000000e+00> : vector<8xf32>
    %279 = vector.multi_reduction <add>, %278, %cst_18 [1] : vector<8x8xf32> to vector<8xf32>
    %280 = vector.shape_cast %279 : vector<8xf32> to vector<8x1xf32>
    %281 = tpu.reciprocal %280 {approx = true} : vector<8x1xf32> -> vector<8x1xf32>
    %282 = vector.broadcast %281 : vector<8x1xf32> to vector<8x8xf32>
    %283 = arith.mulf %278, %282 : vector<8x8xf32>
    %284 = vector.extract_strided_slice %283 {offsets = [0, 0], sizes = [8, 1], strides = [1, 1]} : vector<8x8xf32> to vector<8x1xf32>
    %285 = vector.extract_strided_slice %10 {offsets = [0, 0], sizes = [8, 16], strides = [1, 1]} : vector<8x128xf32> to vector<8x16xf32>
    %286 = vector.broadcast %284 : vector<8x1xf32> to vector<8x16xf32>
    %287 = arith.mulf %286, %285 : vector<8x16xf32>
    %288 = vector.extract_strided_slice %283 {offsets = [0, 1], sizes = [8, 1], strides = [1, 1]} : vector<8x8xf32> to vector<8x1xf32>
    %289 = vector.extract_strided_slice %10 {offsets = [0, 16], sizes = [8, 16], strides = [1, 1]} : vector<8x128xf32> to vector<8x16xf32>
    %290 = vector.broadcast %288 : vector<8x1xf32> to vector<8x16xf32>
    %291 = arith.mulf %290, %289 : vector<8x16xf32>
    %292 = arith.addf %287, %291 : vector<8x16xf32>
    %293 = vector.extract_strided_slice %283 {offsets = [0, 2], sizes = [8, 1], strides = [1, 1]} : vector<8x8xf32> to vector<8x1xf32>
    %294 = vector.extract_strided_slice %10 {offsets = [0, 32], sizes = [8, 16], strides = [1, 1]} : vector<8x128xf32> to vector<8x16xf32>
    %295 = vector.broadcast %293 : vector<8x1xf32> to vector<8x16xf32>
    %296 = arith.mulf %295, %294 : vector<8x16xf32>
    %297 = arith.addf %292, %296 : vector<8x16xf32>
    %298 = vector.extract_strided_slice %283 {offsets = [0, 3], sizes = [8, 1], strides = [1, 1]} : vector<8x8xf32> to vector<8x1xf32>
    %299 = vector.extract_strided_slice %10 {offsets = [0, 48], sizes = [8, 16], strides = [1, 1]} : vector<8x128xf32> to vector<8x16xf32>
    %300 = vector.broadcast %298 : vector<8x1xf32> to vector<8x16xf32>
    %301 = arith.mulf %300, %299 : vector<8x16xf32>
    %302 = arith.addf %297, %301 : vector<8x16xf32>
    %303 = vector.extract_strided_slice %283 {offsets = [0, 4], sizes = [8, 1], strides = [1, 1]} : vector<8x8xf32> to vector<8x1xf32>
    %304 = vector.extract_strided_slice %10 {offsets = [0, 64], sizes = [8, 16], strides = [1, 1]} : vector<8x128xf32> to vector<8x16xf32>
    %305 = vector.broadcast %303 : vector<8x1xf32> to vector<8x16xf32>
    %306 = arith.mulf %305, %304 : vector<8x16xf32>
    %307 = arith.addf %302, %306 : vector<8x16xf32>
    %308 = vector.extract_strided_slice %283 {offsets = [0, 5], sizes = [8, 1], strides = [1, 1]} : vector<8x8xf32> to vector<8x1xf32>
    %309 = vector.extract_strided_slice %10 {offsets = [0, 80], sizes = [8, 16], strides = [1, 1]} : vector<8x128xf32> to vector<8x16xf32>
    %310 = vector.broadcast %308 : vector<8x1xf32> to vector<8x16xf32>
    %311 = arith.mulf %310, %309 : vector<8x16xf32>
    %312 = arith.addf %307, %311 : vector<8x16xf32>
    %313 = vector.extract_strided_slice %283 {offsets = [0, 6], sizes = [8, 1], strides = [1, 1]} : vector<8x8xf32> to vector<8x1xf32>
    %314 = vector.extract_strided_slice %10 {offsets = [0, 96], sizes = [8, 16], strides = [1, 1]} : vector<8x128xf32> to vector<8x16xf32>
    %315 = vector.broadcast %313 : vector<8x1xf32> to vector<8x16xf32>
    %316 = arith.mulf %315, %314 : vector<8x16xf32>
    %317 = arith.addf %312, %316 : vector<8x16xf32>
    %318 = vector.extract_strided_slice %283 {offsets = [0, 7], sizes = [8, 1], strides = [1, 1]} : vector<8x8xf32> to vector<8x1xf32>
    %319 = vector.extract_strided_slice %10 {offsets = [0, 112], sizes = [8, 16], strides = [1, 1]} : vector<8x128xf32> to vector<8x16xf32>
    %320 = vector.broadcast %318 : vector<8x1xf32> to vector<8x16xf32>
    %321 = arith.mulf %320, %319 : vector<8x16xf32>
    %322 = arith.addf %317, %321 : vector<8x16xf32>
    %323 = vector.extract_strided_slice %6 {offsets = [0, 6], sizes = [8, 1], strides = [1, 1]} : vector<8x8xf32> to vector<8x1xf32>
    %324 = vector.broadcast %323 : vector<8x1xf32> to vector<8x8xf32>
    %325 = arith.mulf %324, %9 : vector<8x8xf32>
    %cst_19 = arith.constant dense<0xFF800000> : vector<8xf32>
    %326 = vector.multi_reduction <maximumf>, %325, %cst_19 [1] : vector<8x8xf32> to vector<8xf32>
    %327 = vector.shape_cast %326 : vector<8xf32> to vector<8x1xf32>
    %328 = vector.broadcast %327 : vector<8x1xf32> to vector<8x8xf32>
    %329 = arith.subf %325, %328 : vector<8x8xf32>
    %330 = math.exp %329 : vector<8x8xf32>
    %cst_20 = arith.constant dense<0.000000e+00> : vector<8xf32>
    %331 = vector.multi_reduction <add>, %330, %cst_20 [1] : vector<8x8xf32> to vector<8xf32>
    %332 = vector.shape_cast %331 : vector<8xf32> to vector<8x1xf32>
    %333 = tpu.reciprocal %332 {approx = true} : vector<8x1xf32> -> vector<8x1xf32>
    %334 = vector.broadcast %333 : vector<8x1xf32> to vector<8x8xf32>
    %335 = arith.mulf %330, %334 : vector<8x8xf32>
    %336 = vector.extract_strided_slice %335 {offsets = [0, 0], sizes = [8, 1], strides = [1, 1]} : vector<8x8xf32> to vector<8x1xf32>
    %337 = vector.extract_strided_slice %10 {offsets = [0, 0], sizes = [8, 16], strides = [1, 1]} : vector<8x128xf32> to vector<8x16xf32>
    %338 = vector.broadcast %336 : vector<8x1xf32> to vector<8x16xf32>
    %339 = arith.mulf %338, %337 : vector<8x16xf32>
    %340 = vector.extract_strided_slice %335 {offsets = [0, 1], sizes = [8, 1], strides = [1, 1]} : vector<8x8xf32> to vector<8x1xf32>
    %341 = vector.extract_strided_slice %10 {offsets = [0, 16], sizes = [8, 16], strides = [1, 1]} : vector<8x128xf32> to vector<8x16xf32>
    %342 = vector.broadcast %340 : vector<8x1xf32> to vector<8x16xf32>
    %343 = arith.mulf %342, %341 : vector<8x16xf32>
    %344 = arith.addf %339, %343 : vector<8x16xf32>
    %345 = vector.extract_strided_slice %335 {offsets = [0, 2], sizes = [8, 1], strides = [1, 1]} : vector<8x8xf32> to vector<8x1xf32>
    %346 = vector.extract_strided_slice %10 {offsets = [0, 32], sizes = [8, 16], strides = [1, 1]} : vector<8x128xf32> to vector<8x16xf32>
    %347 = vector.broadcast %345 : vector<8x1xf32> to vector<8x16xf32>
    %348 = arith.mulf %347, %346 : vector<8x16xf32>
    %349 = arith.addf %344, %348 : vector<8x16xf32>
    %350 = vector.extract_strided_slice %335 {offsets = [0, 3], sizes = [8, 1], strides = [1, 1]} : vector<8x8xf32> to vector<8x1xf32>
    %351 = vector.extract_strided_slice %10 {offsets = [0, 48], sizes = [8, 16], strides = [1, 1]} : vector<8x128xf32> to vector<8x16xf32>
    %352 = vector.broadcast %350 : vector<8x1xf32> to vector<8x16xf32>
    %353 = arith.mulf %352, %351 : vector<8x16xf32>
    %354 = arith.addf %349, %353 : vector<8x16xf32>
    %355 = vector.extract_strided_slice %335 {offsets = [0, 4], sizes = [8, 1], strides = [1, 1]} : vector<8x8xf32> to vector<8x1xf32>
    %356 = vector.extract_strided_slice %10 {offsets = [0, 64], sizes = [8, 16], strides = [1, 1]} : vector<8x128xf32> to vector<8x16xf32>
    %357 = vector.broadcast %355 : vector<8x1xf32> to vector<8x16xf32>
    %358 = arith.mulf %357, %356 : vector<8x16xf32>
    %359 = arith.addf %354, %358 : vector<8x16xf32>
    %360 = vector.extract_strided_slice %335 {offsets = [0, 5], sizes = [8, 1], strides = [1, 1]} : vector<8x8xf32> to vector<8x1xf32>
    %361 = vector.extract_strided_slice %10 {offsets = [0, 80], sizes = [8, 16], strides = [1, 1]} : vector<8x128xf32> to vector<8x16xf32>
    %362 = vector.broadcast %360 : vector<8x1xf32> to vector<8x16xf32>
    %363 = arith.mulf %362, %361 : vector<8x16xf32>
    %364 = arith.addf %359, %363 : vector<8x16xf32>
    %365 = vector.extract_strided_slice %335 {offsets = [0, 6], sizes = [8, 1], strides = [1, 1]} : vector<8x8xf32> to vector<8x1xf32>
    %366 = vector.extract_strided_slice %10 {offsets = [0, 96], sizes = [8, 16], strides = [1, 1]} : vector<8x128xf32> to vector<8x16xf32>
    %367 = vector.broadcast %365 : vector<8x1xf32> to vector<8x16xf32>
    %368 = arith.mulf %367, %366 : vector<8x16xf32>
    %369 = arith.addf %364, %368 : vector<8x16xf32>
    %370 = vector.extract_strided_slice %335 {offsets = [0, 7], sizes = [8, 1], strides = [1, 1]} : vector<8x8xf32> to vector<8x1xf32>
    %371 = vector.extract_strided_slice %10 {offsets = [0, 112], sizes = [8, 16], strides = [1, 1]} : vector<8x128xf32> to vector<8x16xf32>
    %372 = vector.broadcast %370 : vector<8x1xf32> to vector<8x16xf32>
    %373 = arith.mulf %372, %371 : vector<8x16xf32>
    %374 = arith.addf %369, %373 : vector<8x16xf32>
    %375 = vector.extract_strided_slice %6 {offsets = [0, 7], sizes = [8, 1], strides = [1, 1]} : vector<8x8xf32> to vector<8x1xf32>
    %376 = vector.broadcast %375 : vector<8x1xf32> to vector<8x8xf32>
    %377 = arith.mulf %376, %9 : vector<8x8xf32>
    %cst_21 = arith.constant dense<0xFF800000> : vector<8xf32>
    %378 = vector.multi_reduction <maximumf>, %377, %cst_21 [1] : vector<8x8xf32> to vector<8xf32>
    %379 = vector.shape_cast %378 : vector<8xf32> to vector<8x1xf32>
    %380 = vector.broadcast %379 : vector<8x1xf32> to vector<8x8xf32>
    %381 = arith.subf %377, %380 : vector<8x8xf32>
    %382 = math.exp %381 : vector<8x8xf32>
    %cst_22 = arith.constant dense<0.000000e+00> : vector<8xf32>
    %383 = vector.multi_reduction <add>, %382, %cst_22 [1] : vector<8x8xf32> to vector<8xf32>
    %384 = vector.shape_cast %383 : vector<8xf32> to vector<8x1xf32>
    %385 = tpu.reciprocal %384 {approx = true} : vector<8x1xf32> -> vector<8x1xf32>
    %386 = vector.broadcast %385 : vector<8x1xf32> to vector<8x8xf32>
    %387 = arith.mulf %382, %386 : vector<8x8xf32>
    %388 = vector.extract_strided_slice %387 {offsets = [0, 0], sizes = [8, 1], strides = [1, 1]} : vector<8x8xf32> to vector<8x1xf32>
    %389 = vector.extract_strided_slice %10 {offsets = [0, 0], sizes = [8, 16], strides = [1, 1]} : vector<8x128xf32> to vector<8x16xf32>
    %390 = vector.broadcast %388 : vector<8x1xf32> to vector<8x16xf32>
    %391 = arith.mulf %390, %389 : vector<8x16xf32>
    %392 = vector.extract_strided_slice %387 {offsets = [0, 1], sizes = [8, 1], strides = [1, 1]} : vector<8x8xf32> to vector<8x1xf32>
    %393 = vector.extract_strided_slice %10 {offsets = [0, 16], sizes = [8, 16], strides = [1, 1]} : vector<8x128xf32> to vector<8x16xf32>
    %394 = vector.broadcast %392 : vector<8x1xf32> to vector<8x16xf32>
    %395 = arith.mulf %394, %393 : vector<8x16xf32>
    %396 = arith.addf %391, %395 : vector<8x16xf32>
    %397 = vector.extract_strided_slice %387 {offsets = [0, 2], sizes = [8, 1], strides = [1, 1]} : vector<8x8xf32> to vector<8x1xf32>
    %398 = vector.extract_strided_slice %10 {offsets = [0, 32], sizes = [8, 16], strides = [1, 1]} : vector<8x128xf32> to vector<8x16xf32>
    %399 = vector.broadcast %397 : vector<8x1xf32> to vector<8x16xf32>
    %400 = arith.mulf %399, %398 : vector<8x16xf32>
    %401 = arith.addf %396, %400 : vector<8x16xf32>
    %402 = vector.extract_strided_slice %387 {offsets = [0, 3], sizes = [8, 1], strides = [1, 1]} : vector<8x8xf32> to vector<8x1xf32>
    %403 = vector.extract_strided_slice %10 {offsets = [0, 48], sizes = [8, 16], strides = [1, 1]} : vector<8x128xf32> to vector<8x16xf32>
    %404 = vector.broadcast %402 : vector<8x1xf32> to vector<8x16xf32>
    %405 = arith.mulf %404, %403 : vector<8x16xf32>
    %406 = arith.addf %401, %405 : vector<8x16xf32>
    %407 = vector.extract_strided_slice %387 {offsets = [0, 4], sizes = [8, 1], strides = [1, 1]} : vector<8x8xf32> to vector<8x1xf32>
    %408 = vector.extract_strided_slice %10 {offsets = [0, 64], sizes = [8, 16], strides = [1, 1]} : vector<8x128xf32> to vector<8x16xf32>
    %409 = vector.broadcast %407 : vector<8x1xf32> to vector<8x16xf32>
    %410 = arith.mulf %409, %408 : vector<8x16xf32>
    %411 = arith.addf %406, %410 : vector<8x16xf32>
    %412 = vector.extract_strided_slice %387 {offsets = [0, 5], sizes = [8, 1], strides = [1, 1]} : vector<8x8xf32> to vector<8x1xf32>
    %413 = vector.extract_strided_slice %10 {offsets = [0, 80], sizes = [8, 16], strides = [1, 1]} : vector<8x128xf32> to vector<8x16xf32>
    %414 = vector.broadcast %412 : vector<8x1xf32> to vector<8x16xf32>
    %415 = arith.mulf %414, %413 : vector<8x16xf32>
    %416 = arith.addf %411, %415 : vector<8x16xf32>
    %417 = vector.extract_strided_slice %387 {offsets = [0, 6], sizes = [8, 1], strides = [1, 1]} : vector<8x8xf32> to vector<8x1xf32>
    %418 = vector.extract_strided_slice %10 {offsets = [0, 96], sizes = [8, 16], strides = [1, 1]} : vector<8x128xf32> to vector<8x16xf32>
    %419 = vector.broadcast %417 : vector<8x1xf32> to vector<8x16xf32>
    %420 = arith.mulf %419, %418 : vector<8x16xf32>
    %421 = arith.addf %416, %420 : vector<8x16xf32>
    %422 = vector.extract_strided_slice %387 {offsets = [0, 7], sizes = [8, 1], strides = [1, 1]} : vector<8x8xf32> to vector<8x1xf32>
    %423 = vector.extract_strided_slice %10 {offsets = [0, 112], sizes = [8, 16], strides = [1, 1]} : vector<8x128xf32> to vector<8x16xf32>
    %424 = vector.broadcast %422 : vector<8x1xf32> to vector<8x16xf32>
    %425 = arith.mulf %424, %423 : vector<8x16xf32>
    %426 = arith.addf %421, %425 : vector<8x16xf32>
    %427 = tpu.concatenate %62, %114, %166, %218, %270, %322, %374, %426 in 1 : vector<8x16xf32>, vector<8x16xf32>, vector<8x16xf32>, vector<8x16xf32>, vector<8x16xf32>, vector<8x16xf32>, vector<8x16xf32>, vector<8x16xf32> -> vector<8x128xf32>
    %c0_23 = arith.constant 0 : index
    %c0_24 = arith.constant 0 : index
    %428 = vector.load %arg5[%c0_23, %c0_24] : memref<8x128xf32, #tpu.memory_space<vmem>>, vector<8x128xf32>
    tpu.vector_store %arg5[%c0_23, %c0_24], %427 {strides = array<i32>} : memref<8x128xf32, #tpu.memory_space<vmem>>, vector<8x128xf32>,
    return
  }
  func.func @transform_0(%arg0: i32) -> (i32, i32) {
    %c0_i32 = arith.constant 0 : i32
    %c0_i32_0 = arith.constant 0 : i32
    return %arg0, %c0_i32 : i32, i32
  }
  func.func @transform_1(%arg0: i32) -> (i32, i32) {
    %c0_i32 = arith.constant 0 : i32
    %c0_i32_0 = arith.constant 0 : i32
    return %arg0, %c0_i32 : i32, i32
  }
  func.func @transform_2(%arg0: i32) -> (i32, i32) {
    %c0_i32 = arith.constant 0 : i32
    %c0_i32_0 = arith.constant 0 : i32
    %c0_i32_1 = arith.constant 0 : i32
    return %c0_i32, %c0_i32_0 : i32, i32
  }
  func.func @transform_3(%arg0: i32) -> (i32, i32) {
    %c0_i32 = arith.constant 0 : i32
    %c0_i32_0 = arith.constant 0 : i32
    return %arg0, %c0_i32 : i32, i32
  }
  func.func @transform_4(%arg0: i32) -> (i32, i32) {
    %c0_i32 = arith.constant 0 : i32
    %c0_i32_0 = arith.constant 0 : i32
    return %arg0, %c0_i32 : i32, i32
  }
}

</mosaic_0001>

<llo_original>
// kernel: tpu_custom_call.1
$region0: #{tpu_custom_call.1}
  #allocation0 [shape = 'u32[]', space=smem, size = 0x4, offset = 0x4, fixed_abs, tag = 'smem constant byte address 0x4 - core index']
  #allocation1 [shape = 'u32[144,128]{1,0:T(1,128)}', space=vmem, size = 0x12000, scoped, tag = 'internal scratch']
  %s0 = inlined_call_operand.vmem [shape: f32[16,1], index: 0, kind: input, shape index: {}]
  %s1 = inlined_call_operand.vmem [shape: f32[16,1], index: 1, kind: input, shape index: {}]
  %s2 = inlined_call_operand.vmem [shape: f32[2,8], index: 2, kind: input, shape index: {}]
  %s3 = inlined_call_operand.vmem [shape: f32[16,128], index: 3, kind: input, shape index: {}]
  %s4 = inlined_call_operand.hbm [shape: f32[16,128], index: 4, kind: output, shape index: {}]
  %s5 = sld [smem:[#allocation0]]
  $region49: #{tpu_custom_call.1} parent=0
    _
  %s7 = ssub.s32 1, %s5
  %s8 = scalar_select 0, %s7, %s5
  $region1: #{tpu_custom_call.1} parent=0
    #allocation2 [shape = 'u8[8192]{0}', space=vmem, size = 0x2000, scoped, tag = 'output window, operand 0']
    #allocation3 [shape = 's32[2]{0}', space=sflag, size = 0x8, scoped, tag = 'scoped memory for tpu_custom_call.1']
    %9 = vsyncpa [#allocation3], 0
    %s10 = scalar_lea.sflag [#allocation3], 1
    %11 = vsyncpa %s10, 0
    loop: start=0, step=1, limit=4
    $region2: #{tpu_custom_call.1} parent=1 // loop_pre_header
      _
    $region3: #{tpu_custom_call.1} parent=1 // loop_header
      %s13 = sphi 0, %s17
      %p14 = scmp.ge.s32.totalorder %s13, 4
      %s23 = sphi 0, %s25
      %s26 = sphi 0, %s23
      %s27 = sphi 0, %s26
      %s43 = sphi 0, %s27
      %s49 = sphi 0, %s51
      %s52 = sphi 0, %s49
      %s53 = sphi 0, %s52
      %s69 = sphi 0, %s53
      %s73 = sphi 0, %s73
      %s75 = sphi 0, %s73
      %s76 = sphi 0, %s75
      %s90 = sphi 0, %s76
      %s96 = sphi 0, %s98
      %s99 = sphi 0, %s96
      %s100 = sphi 0, %s99
      %s116 = sphi 0, %s100
      %s122 = sphi 0, %s124
      %s125 = sphi 0, %s122
      %s126 = sphi 0, %s125
      %s142 = sphi 0, %s126
    $region4: #{tpu_custom_call.1} parent=1 // loop_header_branch
      %16 = sbr.rel (%p14) target = $region8
    $region5: #{tpu_custom_call.1} parent=1 // loop_body
      %s18 = ssub.s32 %s13, 1
      %s19 = ssub.s32 %s13, 2
      %s20 = sadd.s32 %s13, 1
      %s21 = ssub.s32 %s13, %s20
      %p22 = scmp.eq.s32.totalorder %s21, 0
      %s24 = sadd.s32 %s23, 1
      %s25 = scalar_select %p22, %s23, %s24
      %p28 = pneg %p22
      %p29 = scmp.eq.s32.totalorder %s13, 1
      %p30 = por %p28, %p29
      %p31 = scmp.ne.s32.totalorder %s23, %s26
      %p32 = scmp.eq.s32.totalorder %s13, 0
      %p33 = por %p31, %p32
      %p34 = scmp.ne.s32.totalorder %s23, %s26
      %p35 = scmp.eq.s32.totalorder %s18, 1
      %p36 = por %p34, %p35
      %p37 = scmp.ne.s32.totalorder %s26, %s27
      %p38 = scmp.eq.s32.totalorder %s18, 0
      %p39 = por %p37, %p38
      %p40 = scmp.ne.s32.totalorder %s26, %s27
      %p41 = scmp.eq.s32.totalorder %s19, 1
      %p42 = por %p40, %p41
      %p44 = scmp.ne.s32.totalorder %s27, %s43
      %p45 = scmp.eq.s32.totalorder %s19, 0
      %p46 = por %p44, %p45
      %s47 = ssub.s32 %s13, %s20
      %p48 = scmp.eq.s32.totalorder %s47, 0
      %s50 = sadd.s32 %s49, 1
      %s51 = scalar_select %p48, %s49, %s50
      %p54 = pneg %p48
      %p55 = scmp.eq.s32.totalorder %s13, 1
      %p56 = por %p54, %p55
      %p57 = scmp.ne.s32.totalorder %s49, %s52
      %p58 = scmp.eq.s32.totalorder %s13, 0
      %p59 = por %p57, %p58
      %p60 = scmp.ne.s32.totalorder %s49, %s52
      %p61 = scmp.eq.s32.totalorder %s18, 1
      %p62 = por %p60, %p61
      %p63 = scmp.ne.s32.totalorder %s52, %s53
      %p64 = scmp.eq.s32.totalorder %s18, 0
      %p65 = por %p63, %p64
      %p66 = scmp.ne.s32.totalorder %s52, %s53
      %p67 = scmp.eq.s32.totalorder %s19, 1
      %p68 = por %p66, %p67
      %p70 = scmp.ne.s32.totalorder %s53, %s69
      %p71 = scmp.eq.s32.totalorder %s19, 0
      %p72 = por %p70, %p71
      %s74 = sadd.s32 %s73, 1
      %p77 = scmp.eq.s32.totalorder %s13, 1
      %p78 = scmp.ne.s32.totalorder %s73, %s75
      %p79 = scmp.eq.s32.totalorder %s13, 0
      %p80 = por %p78, %p79
      %p81 = scmp.ne.s32.totalorder %s73, %s75
      %p82 = scmp.eq.s32.totalorder %s18, 1
      %p83 = por %p81, %p82
      %p84 = scmp.ne.s32.totalorder %s75, %s76
      %p85 = scmp.eq.s32.totalorder %s18, 0
      %p86 = por %p84, %p85
      %p87 = scmp.ne.s32.totalorder %s75, %s76
      %p88 = scmp.eq.s32.totalorder %s19, 1
      %p89 = por %p87, %p88
      %p91 = scmp.ne.s32.totalorder %s76, %s90
      %p92 = scmp.eq.s32.totalorder %s19, 0
      %p93 = por %p91, %p92
      %s94 = ssub.s32 %s13, %s20
      %p95 = scmp.eq.s32.totalorder %s94, 0
      %s97 = sadd.s32 %s96, 1
      %s98 = scalar_select %p95, %s96, %s97
      %p101 = pneg %p95
      %p102 = scmp.eq.s32.totalorder %s13, 1
      %p103 = por %p101, %p102
      %p104 = scmp.ne.s32.totalorder %s96, %s99
      %p105 = scmp.eq.s32.totalorder %s13, 0
      %p106 = por %p104, %p105
      %p107 = scmp.ne.s32.totalorder %s96, %s99
      %p108 = scmp.eq.s32.totalorder %s18, 1
      %p109 = por %p107, %p108
      %p110 = scmp.ne.s32.totalorder %s99, %s100
      %p111 = scmp.eq.s32.totalorder %s18, 0
      %p112 = por %p110, %p111
      %p113 = scmp.ne.s32.totalorder %s99, %s100
      %p114 = scmp.eq.s32.totalorder %s19, 1
      %p115 = por %p113, %p114
      %p117 = scmp.ne.s32.totalorder %s100, %s116
      %p118 = scmp.eq.s32.totalorder %s19, 0
      %p119 = por %p117, %p118
      %s120 = ssub.s32 %s13, %s20
      %p121 = scmp.eq.s32.totalorder %s120, 0
      %s123 = sadd.s32 %s122, 1
      %s124 = scalar_select %p121, %s122, %s123
      %p127 = pneg %p121
      %p128 = scmp.eq.s32.totalorder %s13, 1
      %p129 = por %p127, %p128
      %p130 = scmp.ne.s32.totalorder %s122, %s125
      %p131 = scmp.eq.s32.totalorder %s13, 0
      %p132 = por %p130, %p131
      %p133 = scmp.ne.s32.totalorder %s122, %s125
      %p134 = scmp.eq.s32.totalorder %s18, 1
      %p135 = por %p133, %p134
      %p136 = scmp.ne.s32.totalorder %s125, %s126
      %p137 = scmp.eq.s32.totalorder %s18, 0
      %p138 = por %p136, %p137
      %p139 = scmp.ne.s32.totalorder %s125, %s126
      %p140 = scmp.eq.s32.totalorder %s19, 1
      %p141 = por %p139, %p140
      %p143 = scmp.ne.s32.totalorder %s126, %s142
      %p144 = scmp.eq.s32.totalorder %s19, 0
      %p145 = por %p143, %p144
      %p146 = scmp.le.s32.totalorder 1, %s13
      %p147 = scmp.lt.s32.totalorder %s13, 3
      %p148 = pnand %p146, %p147
      %p149 = pneg %p148
      // Predicated region
      $region9: #{tpu_custom_call.1} parent=5 // pred_check
        _
      $region10: #{tpu_custom_call.1} parent=5 // pred_check_branch
        %151 = sbr.rel (%p148) target = $region12
      $region11: #{tpu_custom_call.1} parent=5 // pred_region
        %s152 = ssub.s32 %s13, 1
        // Predicated region
        $region13: #{tpu_custom_call.1} parent=11 // pred_check
          %p153 = pneg %p86
        $region14: #{tpu_custom_call.1} parent=11 // pred_check_branch
          %155 = sbr.rel (%p153) target = $region16
        $region15: #{tpu_custom_call.1} parent=11 // pred_region
          _
        $region16: #{tpu_custom_call.1} parent=11 // pred_fallthru
          _
      $region12: #{tpu_custom_call.1} parent=5 // pred_fallthru
        _
      %p156 = scmp.lt.s32.totalorder %s13, 2
      // Predicated region
      $region17: #{tpu_custom_call.1} parent=5 // pred_check
        %p157 = pneg %p156
      $region18: #{tpu_custom_call.1} parent=5 // pred_check_branch
        %159 = sbr.rel (%p157) target = $region20
      $region19: #{tpu_custom_call.1} parent=5 // pred_region
        // Predicated region
        $region21: #{tpu_custom_call.1} parent=19 // pred_check
          %p160 = pneg %p33
        $region22: #{tpu_custom_call.1} parent=19 // pred_check_branch
          %162 = sbr.rel (%p160) target = $region24
        $region23: #{tpu_custom_call.1} parent=19 // pred_region
          %p163 = scmp.lt.s32.totalorder %s13, 1
          %s164 = scalar_select %p163, %s13, 1
          %s165 = smul.addr %s164, 8
          %s166 = scalar_lea.vmem %s0, %s165
        $region24: #{tpu_custom_call.1} parent=19 // pred_fallthru
          _
        // Predicated region
        $region25: #{tpu_custom_call.1} parent=19 // pred_check
          %p167 = pneg %p59
        $region26: #{tpu_custom_call.1} parent=19 // pred_check_branch
          %169 = sbr.rel (%p167) target = $region28
        $region27: #{tpu_custom_call.1} parent=19 // pred_region
          %p170 = scmp.lt.s32.totalorder %s13, 1
          %s171 = scalar_select %p170, %s13, 1
          %s172 = smul.addr %s171, 8
          %s173 = scalar_lea.vmem %s1, %s172
        $region28: #{tpu_custom_call.1} parent=19 // pred_fallthru
          _
        // Predicated region
        $region29: #{tpu_custom_call.1} parent=19 // pred_check
          %p174 = pneg %p106
        $region30: #{tpu_custom_call.1} parent=19 // pred_check_branch
          %176 = sbr.rel (%p174) target = $region32
        $region31: #{tpu_custom_call.1} parent=19 // pred_region
          %p177 = scmp.lt.s32.totalorder %s13, 1
          %s178 = scalar_select %p177, %s13, 1
          %s179 = smul.addr %s178, 8
          %s180 = scalar_lea.vmem %s3, %s179
        $region32: #{tpu_custom_call.1} parent=19 // pred_fallthru
          _
      $region20: #{tpu_custom_call.1} parent=5 // pred_fallthru
        _
      %p181 = scmp.le.s32.totalorder 1, %s13
      %p182 = scmp.lt.s32.totalorder %s13, 3
      %p183 = pnand %p181, %p182
      %p184 = pneg %p183
      // Predicated region
      $region33: #{tpu_custom_call.1} parent=5 // pred_check
        _
      $region34: #{tpu_custom_call.1} parent=5 // pred_check_branch
        %186 = sbr.rel (%p183) target = $region36
      $region35: #{tpu_custom_call.1} parent=5 // pred_region
        %s187 = ssub.s32 %s13, 1
        %p188 = scmp.lt.s32.totalorder %s18, 1
        %s189 = scalar_select %p188, %s18, 1
        %s190 = smul.addr %s189, 8
        %s191 = scalar_lea.vmem %s0, %s190
        %p192 = pneg %p39
        %p193 = pneg %p36
        %p194 = scmp.lt.s32.totalorder %s18, 1
        %s195 = scalar_select %p194, %s18, 1
        %s196 = smul.addr %s195, 8
        %s197 = scalar_lea.vmem %s1, %s196
        %p198 = pneg %p65
        %p199 = pneg %p62
        %p200 = pneg %p86
        %p201 = pneg %p83
        %p202 = scmp.lt.s32.totalorder %s18, 1
        %s203 = scalar_select %p202, %s18, 1
        %s204 = smul.addr %s203, 8
        %s205 = scalar_lea.vmem %s3, %s204
        %p206 = pneg %p112
        %p207 = pneg %p109
        %p208 = pneg %p138
        %p209 = pneg %p135
        %s210 = sand.u32 %s125, 1
        %s211 = scalar_lea.sflag [#allocation3], %s210
        %s212 = sand.u32 %s125, 1
        %s213 = smul.addr %s212, 8
        %s214 = scalar_lea.vmem [#allocation2], %s213
        %p215 = scmp.lt.s32.totalorder %s18, 1
        %s216 = scalar_select %p215, %s18, 1
        %s217 = smul.addr %s216, 8
        %s218 = scalar_lea.vmem %s0, %s217
        %p219 = scmp.lt.s32.totalorder %s18, 1
        %s220 = scalar_select %p219, %s18, 1
        %s221 = smul.addr %s220, 8
        %s222 = scalar_lea.vmem %s1, %s221
        %p223 = scmp.lt.s32.totalorder %s18, 1
        %s224 = scalar_select %p223, %s18, 1
        %s225 = smul.addr %s224, 8
        %s226 = scalar_lea.vmem %s3, %s225
        %v227 = vld [vmem:[%s218] sm:$0xff]
        %v228 = vld [vmem:[%s222] sm:$0xff]
        %v229 = vld [vmem:[%s2] sm:$0x1]
        %v230 = vld [vmem:[%s2 + $0x1] sm:$0x1]
        %232 = vset.pattern.permute.xlu0 0
        %233 = vperm.xlu0 %232, %v227
        %v234 = vpop.permute.xlu0 %233
        %v236 = vlaneseq
        %v237 = vshrl.u32 %v236, 7
        %v238 = vsub.s32 0, %v237
        %v239 = vrot.slane %v229, %v238
        %v240 = vmul.f32 %v234, %v239
        %242 = vset.pattern.permute.xlu0 0
        %243 = vperm.xlu0 %242, %v228
        %v244 = vpop.permute.xlu0 %243
        %v246 = vlaneseq
        %v247 = vshrl.u32 %v246, 7
        %v248 = vsub.s32 0, %v247
        %v249 = vrot.slane %v230, %v248
        %v250 = vmul.f32 %v244, %v249
        %v251 = vld [vmem:[%s226] sm:$0xff]
        %253 = vset.pattern.permute.xlu0 0
        %254 = vperm.xlu0 %253, %v240
        %v255 = vpop.permute.xlu0 %254
        %v257 = vmul.f32 %v255, %v250
        %vm258 = vcmask 64512
        %v259 = vsel %vm258, %v257, -inf
        %260 = vmax.xlane.f32.xlu0 %v259
        %v261 = vpop.xlane.xlu0 %260
        %v262 = vsub.f32 %v257, %v261
        %v263 = vmul.f32 %v262, 1.442695
        %v264 = vpow.pop %v263
        %v265 = vsel %vm258, %v264, 0.0
        %266 = vadd.xlane.f32.xlu0 %v265
        %v267 = vpop.xlane.xlu0 %266
        %v268 = vrcp.pop %v267
        %v269 = vmul.f32 %v264, %v268
        %271 = vset.pattern.permute.xlu0 0
        %272 = vperm.xlu0 %271, %v269
        %v273 = vpop.permute.xlu0 %272
        %v275 = vmul.f32 %v273, %v251
        %276 = vset.pattern.permute.xlu0 1
        %277 = vperm.xlu0 %276, %v269
        %v278 = vpop.permute.xlu0 %277
        %v280 = vmul.f32 %v278, %v251
        %282 = vrot.lane.b32.xlu0 %v280, 112
        %v283 = vpop.permute.xlu0 %282
        %v285 = vadd.f32 %v275, %v283
        %286 = vset.pattern.permute.xlu0 2
        %287 = vperm.xlu0 %286, %v269
        %v288 = vpop.permute.xlu0 %287
        %v290 = vmul.f32 %v288, %v251
        %292 = vrot.lane.b32.xlu0 %v290, 96
        %v293 = vpop.permute.xlu0 %292
        %v295 = vadd.f32 %v285, %v293
        %296 = vset.pattern.permute.xlu0 3
        %297 = vperm.xlu0 %296, %v269
        %v298 = vpop.permute.xlu0 %297
        %v300 = vmul.f32 %v298, %v251
        %302 = vrot.lane.b32.xlu0 %v300, 80
        %v303 = vpop.permute.xlu0 %302
        %v305 = vadd.f32 %v295, %v303
        %306 = vset.pattern.permute.xlu0 4
        %307 = vperm.xlu0 %306, %v269
        %v308 = vpop.permute.xlu0 %307
        %v310 = vmul.f32 %v308, %v251
        %312 = vrot.lane.b32.xlu0 %v310, 64
        %v313 = vpop.permute.xlu0 %312
        %v315 = vadd.f32 %v305, %v313
        %316 = vset.pattern.permute.xlu0 5
        %317 = vperm.xlu0 %316, %v269
        %v318 = vpop.permute.xlu0 %317
        %v320 = vmul.f32 %v318, %v251
        %322 = vrot.lane.b32.xlu0 %v320, 48
        %v323 = vpop.permute.xlu0 %322
        %v325 = vadd.f32 %v315, %v323
        %326 = vset.pattern.permute.xlu0 6
        %327 = vperm.xlu0 %326, %v269
        %v328 = vpop.permute.xlu0 %327
        %v330 = vmul.f32 %v328, %v251
        %332 = vrot.lane.b32.xlu0 %v330, 32
        %v333 = vpop.permute.xlu0 %332
        %v335 = vadd.f32 %v325, %v333
        %336 = vset.pattern.permute.xlu0 7
        %337 = vperm.xlu0 %336, %v269
        %v338 = vpop.permute.xlu0 %337
        %v340 = vmul.f32 %v338, %v251
        %342 = vrot.lane.b32.xlu0 %v340, 16
        %v343 = vpop.permute.xlu0 %342
        %v345 = vadd.f32 %v335, %v343
        %346 = vset.pattern.permute.xlu0 1
        %347 = vperm.xlu0 %346, %v240
        %v348 = vpop.permute.xlu0 %347
        %v350 = vmul.f32 %v348, %v250
        %v351 = vsel %vm258, %v350, -inf
        %352 = vmax.xlane.f32.xlu0 %v351
        %v353 = vpop.xlane.xlu0 %352
        %v354 = vsub.f32 %v350, %v353
        %v355 = vmul.f32 %v354, 1.442695
        %v356 = vpow.pop %v355
        %v357 = vsel %vm258, %v356, 0.0
        %358 = vadd.xlane.f32.xlu0 %v357
        %v359 = vpop.xlane.xlu0 %358
        %v360 = vrcp.pop %v359
        %v361 = vmul.f32 %v356, %v360
        %363 = vset.pattern.permute.xlu0 0
        %364 = vperm.xlu0 %363, %v361
        %v365 = vpop.permute.xlu0 %364
        %v367 = vmul.f32 %v365, %v251
        %368 = vset.pattern.permute.xlu0 1
        %369 = vperm.xlu0 %368, %v361
        %v370 = vpop.permute.xlu0 %369
        %v372 = vmul.f32 %v370, %v251
        %374 = vrot.lane.b32.xlu0 %v372, 112
        %v375 = vpop.permute.xlu0 %374
        %v377 = vadd.f32 %v367, %v375
        %378 = vset.pattern.permute.xlu0 2
        %379 = vperm.xlu0 %378, %v361
        %v380 = vpop.permute.xlu0 %379
        %v382 = vmul.f32 %v380, %v251
        %384 = vrot.lane.b32.xlu0 %v382, 96
        %v385 = vpop.permute.xlu0 %384
        %v387 = vadd.f32 %v377, %v385
        %388 = vset.pattern.permute.xlu0 3
        %389 = vperm.xlu0 %388, %v361
        %v390 = vpop.permute.xlu0 %389
        %v392 = vmul.f32 %v390, %v251
        %394 = vrot.lane.b32.xlu0 %v392, 80
        %v395 = vpop.permute.xlu0 %394
        %v397 = vadd.f32 %v387, %v395
        %398 = vset.pattern.permute.xlu0 4
        %399 = vperm.xlu0 %398, %v361
        %v400 = vpop.permute.xlu0 %399
        %v402 = vmul.f32 %v400, %v251
        %404 = vrot.lane.b32.xlu0 %v402, 64
        %v405 = vpop.permute.xlu0 %404
        %v407 = vadd.f32 %v397, %v405
        %408 = vset.pattern.permute.xlu0 5
        %409 = vperm.xlu0 %408, %v361
        %v410 = vpop.permute.xlu0 %409
        %v412 = vmul.f32 %v410, %v251
        %414 = vrot.lane.b32.xlu0 %v412, 48
        %v415 = vpop.permute.xlu0 %414
        %v417 = vadd.f32 %v407, %v415
        %418 = vset.pattern.permute.xlu0 6
        %419 = vperm.xlu0 %418, %v361
        %v420 = vpop.permute.xlu0 %419
        %v422 = vmul.f32 %v420, %v251
        %424 = vrot.lane.b32.xlu0 %v422, 32
        %v425 = vpop.permute.xlu0 %424
        %v427 = vadd.f32 %v417, %v425
        %428 = vset.pattern.permute.xlu0 7
        %429 = vperm.xlu0 %428, %v361
        %v430 = vpop.permute.xlu0 %429
        %v432 = vmul.f32 %v430, %v251
        %434 = vrot.lane.b32.xlu0 %v432, 16
        %v435 = vpop.permute.xlu0 %434
        %v437 = vadd.f32 %v427, %v435
        %438 = vset.pattern.permute.xlu0 2
        %439 = vperm.xlu0 %438, %v240
        %v440 = vpop.permute.xlu0 %439
        %v442 = vmul.f32 %v440, %v250
        %v443 = vsel %vm258, %v442, -inf
        %444 = vmax.xlane.f32.xlu0 %v443
        %v445 = vpop.xlane.xlu0 %444
        %v446 = vsub.f32 %v442, %v445
        %v447 = vmul.f32 %v446, 1.442695
        %v448 = vpow.pop %v447
        %v449 = vsel %vm258, %v448, 0.0
        %450 = vadd.xlane.f32.xlu0 %v449
        %v451 = vpop.xlane.xlu0 %450
        %v452 = vrcp.pop %v451
        %v453 = vmul.f32 %v448, %v452
        %455 = vset.pattern.permute.xlu0 0
        %456 = vperm.xlu0 %455, %v453
        %v457 = vpop.permute.xlu0 %456
        %v459 = vmul.f32 %v457, %v251
        %460 = vset.pattern.permute.xlu0 1
        %461 = vperm.xlu0 %460, %v453
        %v462 = vpop.permute.xlu0 %461
        %v464 = vmul.f32 %v462, %v251
        %466 = vrot.lane.b32.xlu0 %v464, 112
        %v467 = vpop.permute.xlu0 %466
        %v469 = vadd.f32 %v459, %v467
        %470 = vset.pattern.permute.xlu0 2
        %471 = vperm.xlu0 %470, %v453
        %v472 = vpop.permute.xlu0 %471
        %v474 = vmul.f32 %v472, %v251
        %476 = vrot.lane.b32.xlu0 %v474, 96
        %v477 = vpop.permute.xlu0 %476
        %v479 = vadd.f32 %v469, %v477
        %480 = vset.pattern.permute.xlu0 3
        %481 = vperm.xlu0 %480, %v453
        %v482 = vpop.permute.xlu0 %481
        %v484 = vmul.f32 %v482, %v251
        %486 = vrot.lane.b32.xlu0 %v484, 80
        %v487 = vpop.permute.xlu0 %486
        %v489 = vadd.f32 %v479, %v487
        %490 = vset.pattern.permute.xlu0 4
        %491 = vperm.xlu0 %490, %v453
        %v492 = vpop.permute.xlu0 %491
        %v494 = vmul.f32 %v492, %v251
        %496 = vrot.lane.b32.xlu0 %v494, 64
        %v497 = vpop.permute.xlu0 %496
        %v499 = vadd.f32 %v489, %v497
        %500 = vset.pattern.permute.xlu0 5
        %501 = vperm.xlu0 %500, %v453
        %v502 = vpop.permute.xlu0 %501
        %v504 = vmul.f32 %v502, %v251
        %506 = vrot.lane.b32.xlu0 %v504, 48
        %v507 = vpop.permute.xlu0 %506
        %v509 = vadd.f32 %v499, %v507
        %510 = vset.pattern.permute.xlu0 6
        %511 = vperm.xlu0 %510, %v453
        %v512 = vpop.permute.xlu0 %511
        %v514 = vmul.f32 %v512, %v251
        %516 = vrot.lane.b32.xlu0 %v514, 32
        %v517 = vpop.permute.xlu0 %516
        %v519 = vadd.f32 %v509, %v517
        %520 = vset.pattern.permute.xlu0 7
        %521 = vperm.xlu0 %520, %v453
        %v522 = vpop.permute.xlu0 %521
        %v524 = vmul.f32 %v522, %v251
        %526 = vrot.lane.b32.xlu0 %v524, 16
        %v527 = vpop.permute.xlu0 %526
        %v529 = vadd.f32 %v519, %v527
        %530 = vset.pattern.permute.xlu0 3
        %531 = vperm.xlu0 %530, %v240
        %v532 = vpop.permute.xlu0 %531
        %v534 = vmul.f32 %v532, %v250
        %v535 = vsel %vm258, %v534, -inf
        %536 = vmax.xlane.f32.xlu0 %v535
        %v537 = vpop.xlane.xlu0 %536
        %v538 = vsub.f32 %v534, %v537
        %v539 = vmul.f32 %v538, 1.442695
        %v540 = vpow.pop %v539
        %v541 = vsel %vm258, %v540, 0.0
        %542 = vadd.xlane.f32.xlu0 %v541
        %v543 = vpop.xlane.xlu0 %542
        %v544 = vrcp.pop %v543
        %v545 = vmul.f32 %v540, %v544
        %547 = vset.pattern.permute.xlu0 0
        %548 = vperm.xlu0 %547, %v545
        %v549 = vpop.permute.xlu0 %548
        %v551 = vmul.f32 %v549, %v251
        %552 = vset.pattern.permute.xlu0 1
        %553 = vperm.xlu0 %552, %v545
        %v554 = vpop.permute.xlu0 %553
        %v556 = vmul.f32 %v554, %v251
        %558 = vrot.lane.b32.xlu0 %v556, 112
        %v559 = vpop.permute.xlu0 %558
        %v561 = vadd.f32 %v551, %v559
        %562 = vset.pattern.permute.xlu0 2
        %563 = vperm.xlu0 %562, %v545
        %v564 = vpop.permute.xlu0 %563
        %v566 = vmul.f32 %v564, %v251
        %568 = vrot.lane.b32.xlu0 %v566, 96
        %v569 = vpop.permute.xlu0 %568
        %v571 = vadd.f32 %v561, %v569
        %572 = vset.pattern.permute.xlu0 3
        %573 = vperm.xlu0 %572, %v545
        %v574 = vpop.permute.xlu0 %573
        %v576 = vmul.f32 %v574, %v251
        %578 = vrot.lane.b32.xlu0 %v576, 80
        %v579 = vpop.permute.xlu0 %578
        %v581 = vadd.f32 %v571, %v579
        %582 = vset.pattern.permute.xlu0 4
        %583 = vperm.xlu0 %582, %v545
        %v584 = vpop.permute.xlu0 %583
        %v586 = vmul.f32 %v584, %v251
        %588 = vrot.lane.b32.xlu0 %v586, 64
        %v589 = vpop.permute.xlu0 %588
        %v591 = vadd.f32 %v581, %v589
        %592 = vset.pattern.permute.xlu0 5
        %593 = vperm.xlu0 %592, %v545
        %v594 = vpop.permute.xlu0 %593
        %v596 = vmul.f32 %v594, %v251
        %598 = vrot.lane.b32.xlu0 %v596, 48
        %v599 = vpop.permute.xlu0 %598
        %v601 = vadd.f32 %v591, %v599
        %602 = vset.pattern.permute.xlu0 6
        %603 = vperm.xlu0 %602, %v545
        %v604 = vpop.permute.xlu0 %603
        %v606 = vmul.f32 %v604, %v251
        %608 = vrot.lane.b32.xlu0 %v606, 32
        %v609 = vpop.permute.xlu0 %608
        %v611 = vadd.f32 %v601, %v609
        %612 = vset.pattern.permute.xlu0 7
        %613 = vperm.xlu0 %612, %v545
        %v614 = vpop.permute.xlu0 %613
        %v616 = vmul.f32 %v614, %v251
        %618 = vrot.lane.b32.xlu0 %v616, 16
        %v619 = vpop.permute.xlu0 %618
        %v621 = vadd.f32 %v611, %v619
        %622 = vset.pattern.permute.xlu0 4
        %623 = vperm.xlu0 %622, %v240
        %v624 = vpop.permute.xlu0 %623
        %v626 = vmul.f32 %v624, %v250
        %v627 = vsel %vm258, %v626, -inf
        %628 = vmax.xlane.f32.xlu0 %v627
        %v629 = vpop.xlane.xlu0 %628
        %v630 = vsub.f32 %v626, %v629
        %v631 = vmul.f32 %v630, 1.442695
        %v632 = vpow.pop %v631
        %v633 = vsel %vm258, %v632, 0.0
        %634 = vadd.xlane.f32.xlu0 %v633
        %v635 = vpop.xlane.xlu0 %634
        %v636 = vrcp.pop %v635
        %v637 = vmul.f32 %v632, %v636
        %639 = vset.pattern.permute.xlu0 0
        %640 = vperm.xlu0 %639, %v637
        %v641 = vpop.permute.xlu0 %640
        %v643 = vmul.f32 %v641, %v251
        %644 = vset.pattern.permute.xlu0 1
        %645 = vperm.xlu0 %644, %v637
        %v646 = vpop.permute.xlu0 %645
        %v648 = vmul.f32 %v646, %v251
        %650 = vrot.lane.b32.xlu0 %v648, 112
        %v651 = vpop.permute.xlu0 %650
        %v653 = vadd.f32 %v643, %v651
        %654 = vset.pattern.permute.xlu0 2
        %655 = vperm.xlu0 %654, %v637
        %v656 = vpop.permute.xlu0 %655
        %v658 = vmul.f32 %v656, %v251
        %660 = vrot.lane.b32.xlu0 %v658, 96
        %v661 = vpop.permute.xlu0 %660
        %v663 = vadd.f32 %v653, %v661
        %664 = vset.pattern.permute.xlu0 3
        %665 = vperm.xlu0 %664, %v637
        %v666 = vpop.permute.xlu0 %665
        %v668 = vmul.f32 %v666, %v251
        %670 = vrot.lane.b32.xlu0 %v668, 80
        %v671 = vpop.permute.xlu0 %670
        %v673 = vadd.f32 %v663, %v671
        %674 = vset.pattern.permute.xlu0 4
        %675 = vperm.xlu0 %674, %v637
        %v676 = vpop.permute.xlu0 %675
        %v678 = vmul.f32 %v676, %v251
        %680 = vrot.lane.b32.xlu0 %v678, 64
        %v681 = vpop.permute.xlu0 %680
        %v683 = vadd.f32 %v673, %v681
        %684 = vset.pattern.permute.xlu0 5
        %685 = vperm.xlu0 %684, %v637
        %v686 = vpop.permute.xlu0 %685
        %v688 = vmul.f32 %v686, %v251
        %690 = vrot.lane.b32.xlu0 %v688, 48
        %v691 = vpop.permute.xlu0 %690
        %v693 = vadd.f32 %v683, %v691
        %694 = vset.pattern.permute.xlu0 6
        %695 = vperm.xlu0 %694, %v637
        %v696 = vpop.permute.xlu0 %695
        %v698 = vmul.f32 %v696, %v251
        %700 = vrot.lane.b32.xlu0 %v698, 32
        %v701 = vpop.permute.xlu0 %700
        %v703 = vadd.f32 %v693, %v701
        %704 = vset.pattern.permute.xlu0 7
        %705 = vperm.xlu0 %704, %v637
        %v706 = vpop.permute.xlu0 %705
        %v708 = vmul.f32 %v706, %v251
        %710 = vrot.lane.b32.xlu0 %v708, 16
        %v711 = vpop.permute.xlu0 %710
        %v713 = vadd.f32 %v703, %v711
        %714 = vset.pattern.permute.xlu0 5
        %715 = vperm.xlu0 %714, %v240
        %v716 = vpop.permute.xlu0 %715
        %v718 = vmul.f32 %v716, %v250
        %v719 = vsel %vm258, %v718, -inf
        %720 = vmax.xlane.f32.xlu0 %v719
        %v721 = vpop.xlane.xlu0 %720
        %v722 = vsub.f32 %v718, %v721
        %v723 = vmul.f32 %v722, 1.442695
        %v724 = vpow.pop %v723
        %v725 = vsel %vm258, %v724, 0.0
        %726 = vadd.xlane.f32.xlu0 %v725
        %v727 = vpop.xlane.xlu0 %726
        %v728 = vrcp.pop %v727
        %v729 = vmul.f32 %v724, %v728
        %731 = vset.pattern.permute.xlu0 0
        %732 = vperm.xlu0 %731, %v729
        %v733 = vpop.permute.xlu0 %732
        %v735 = vmul.f32 %v733, %v251
        %736 = vset.pattern.permute.xlu0 1
        %737 = vperm.xlu0 %736, %v729
        %v738 = vpop.permute.xlu0 %737
        %v740 = vmul.f32 %v738, %v251
        %742 = vrot.lane.b32.xlu0 %v740, 112
        %v743 = vpop.permute.xlu0 %742
        %v745 = vadd.f32 %v735, %v743
        %746 = vset.pattern.permute.xlu0 2
        %747 = vperm.xlu0 %746, %v729
        %v748 = vpop.permute.xlu0 %747
        %v750 = vmul.f32 %v748, %v251
        %752 = vrot.lane.b32.xlu0 %v750, 96
        %v753 = vpop.permute.xlu0 %752
        %v755 = vadd.f32 %v745, %v753
        %756 = vset.pattern.permute.xlu0 3
        %757 = vperm.xlu0 %756, %v729
        %v758 = vpop.permute.xlu0 %757
        %v760 = vmul.f32 %v758, %v251
        %762 = vrot.lane.b32.xlu0 %v760, 80
        %v763 = vpop.permute.xlu0 %762
        %v765 = vadd.f32 %v755, %v763
        %766 = vset.pattern.permute.xlu0 4
        %767 = vperm.xlu0 %766, %v729
        %v768 = vpop.permute.xlu0 %767
        %v770 = vmul.f32 %v768, %v251
        %772 = vrot.lane.b32.xlu0 %v770, 64
        %v773 = vpop.permute.xlu0 %772
        %v775 = vadd.f32 %v765, %v773
        %776 = vset.pattern.permute.xlu0 5
        %777 = vperm.xlu0 %776, %v729
        %v778 = vpop.permute.xlu0 %777
        %v780 = vmul.f32 %v778, %v251
        %782 = vrot.lane.b32.xlu0 %v780, 48
        %v783 = vpop.permute.xlu0 %782
        %v785 = vadd.f32 %v775, %v783
        %786 = vset.pattern.permute.xlu0 6
        %787 = vperm.xlu0 %786, %v729
        %v788 = vpop.permute.xlu0 %787
        %v790 = vmul.f32 %v788, %v251
        %792 = vrot.lane.b32.xlu0 %v790, 32
        %v793 = vpop.permute.xlu0 %792
        %v795 = vadd.f32 %v785, %v793
        %796 = vset.pattern.permute.xlu0 7
        %797 = vperm.xlu0 %796, %v729
        %v798 = vpop.permute.xlu0 %797
        %v800 = vmul.f32 %v798, %v251
        %802 = vrot.lane.b32.xlu0 %v800, 16
        %v803 = vpop.permute.xlu0 %802
        %v805 = vadd.f32 %v795, %v803
        %806 = vset.pattern.permute.xlu0 6
        %807 = vperm.xlu0 %806, %v240
        %v808 = vpop.permute.xlu0 %807
        %v810 = vmul.f32 %v808, %v250
        %v811 = vsel %vm258, %v810, -inf
        %812 = vmax.xlane.f32.xlu0 %v811
        %v813 = vpop.xlane.xlu0 %812
        %v814 = vsub.f32 %v810, %v813
        %v815 = vmul.f32 %v814, 1.442695
        %v816 = vpow.pop %v815
        %v817 = vsel %vm258, %v816, 0.0
        %818 = vadd.xlane.f32.xlu0 %v817
        %v819 = vpop.xlane.xlu0 %818
        %v820 = vrcp.pop %v819
        %v821 = vmul.f32 %v816, %v820
        %823 = vset.pattern.permute.xlu0 0
        %824 = vperm.xlu0 %823, %v821
        %v825 = vpop.permute.xlu0 %824
        %v827 = vmul.f32 %v825, %v251
        %828 = vset.pattern.permute.xlu0 1
        %829 = vperm.xlu0 %828, %v821
        %v830 = vpop.permute.xlu0 %829
        %v832 = vmul.f32 %v830, %v251
        %834 = vrot.lane.b32.xlu0 %v832, 112
        %v835 = vpop.permute.xlu0 %834
        %v837 = vadd.f32 %v827, %v835
        %838 = vset.pattern.permute.xlu0 2
        %839 = vperm.xlu0 %838, %v821
        %v840 = vpop.permute.xlu0 %839
        %v842 = vmul.f32 %v840, %v251
        %844 = vrot.lane.b32.xlu0 %v842, 96
        %v845 = vpop.permute.xlu0 %844
        %v847 = vadd.f32 %v837, %v845
        %848 = vset.pattern.permute.xlu0 3
        %849 = vperm.xlu0 %848, %v821
        %v850 = vpop.permute.xlu0 %849
        %v852 = vmul.f32 %v850, %v251
        %854 = vrot.lane.b32.xlu0 %v852, 80
        %v855 = vpop.permute.xlu0 %854
        %v857 = vadd.f32 %v847, %v855
        %858 = vset.pattern.permute.xlu0 4
        %859 = vperm.xlu0 %858, %v821
        %v860 = vpop.permute.xlu0 %859
        %v862 = vmul.f32 %v860, %v251
        %864 = vrot.lane.b32.xlu0 %v862, 64
        %v865 = vpop.permute.xlu0 %864
        %v867 = vadd.f32 %v857, %v865
        %868 = vset.pattern.permute.xlu0 5
        %869 = vperm.xlu0 %868, %v821
        %v870 = vpop.permute.xlu0 %869
        %v872 = vmul.f32 %v870, %v251
        %874 = vrot.lane.b32.xlu0 %v872, 48
        %v875 = vpop.permute.xlu0 %874
        %v877 = vadd.f32 %v867, %v875
        %878 = vset.pattern.permute.xlu0 6
        %879 = vperm.xlu0 %878, %v821
        %v880 = vpop.permute.xlu0 %879
        %v882 = vmul.f32 %v880, %v251
        %884 = vrot.lane.b32.xlu0 %v882, 32
        %v885 = vpop.permute.xlu0 %884
        %v887 = vadd.f32 %v877, %v885
        %888 = vset.pattern.permute.xlu0 7
        %889 = vperm.xlu0 %888, %v821
        %v890 = vpop.permute.xlu0 %889
        %v892 = vmul.f32 %v890, %v251
        %894 = vrot.lane.b32.xlu0 %v892, 16
        %v895 = vpop.permute.xlu0 %894
        %v897 = vadd.f32 %v887, %v895
        %898 = vset.pattern.permute.xlu0 7
        %899 = vperm.xlu0 %898, %v240
        %v900 = vpop.permute.xlu0 %899
        %v902 = vmul.f32 %v900, %v250
        %v903 = vsel %vm258, %v902, -inf
        %904 = vmax.xlane.f32.xlu0 %v903
        %v905 = vpop.xlane.xlu0 %904
        %v906 = vsub.f32 %v902, %v905
        %v907 = vmul.f32 %v906, 1.442695
        %v908 = vpow.pop %v907
        %v909 = vsel %vm258, %v908, 0.0
        %910 = vadd.xlane.f32.xlu0 %v909
        %v911 = vpop.xlane.xlu0 %910
        %v912 = vrcp.pop %v911
        %v913 = vmul.f32 %v908, %v912
        %915 = vset.pattern.permute.xlu0 0
        %916 = vperm.xlu0 %915, %v913
        %v917 = vpop.permute.xlu0 %916
        %v919 = vmul.f32 %v917, %v251
        %920 = vset.pattern.permute.xlu0 1
        %921 = vperm.xlu0 %920, %v913
        %v922 = vpop.permute.xlu0 %921
        %v924 = vmul.f32 %v922, %v251
        %926 = vrot.lane.b32.xlu0 %v924, 112
        %v927 = vpop.permute.xlu0 %926
        %v929 = vadd.f32 %v919, %v927
        %930 = vset.pattern.permute.xlu0 2
        %931 = vperm.xlu0 %930, %v913
        %v932 = vpop.permute.xlu0 %931
        %v934 = vmul.f32 %v932, %v251
        %936 = vrot.lane.b32.xlu0 %v934, 96
        %v937 = vpop.permute.xlu0 %936
        %v939 = vadd.f32 %v929, %v937
        %940 = vset.pattern.permute.xlu0 3
        %941 = vperm.xlu0 %940, %v913
        %v942 = vpop.permute.xlu0 %941
        %v944 = vmul.f32 %v942, %v251
        %946 = vrot.lane.b32.xlu0 %v944, 80
        %v947 = vpop.permute.xlu0 %946
        %v949 = vadd.f32 %v939, %v947
        %950 = vset.pattern.permute.xlu0 4
        %951 = vperm.xlu0 %950, %v913
        %v952 = vpop.permute.xlu0 %951
        %v954 = vmul.f32 %v952, %v251
        %956 = vrot.lane.b32.xlu0 %v954, 64
        %v957 = vpop.permute.xlu0 %956
        %v959 = vadd.f32 %v949, %v957
        %960 = vset.pattern.permute.xlu0 5
        %961 = vperm.xlu0 %960, %v913
        %v962 = vpop.permute.xlu0 %961
        %v964 = vmul.f32 %v962, %v251
        %966 = vrot.lane.b32.xlu0 %v964, 48
        %v967 = vpop.permute.xlu0 %966
        %v969 = vadd.f32 %v959, %v967
        %970 = vset.pattern.permute.xlu0 6
        %971 = vperm.xlu0 %970, %v913
        %v972 = vpop.permute.xlu0 %971
        %v974 = vmul.f32 %v972, %v251
        %976 = vrot.lane.b32.xlu0 %v974, 32
        %v977 = vpop.permute.xlu0 %976
        %v979 = vadd.f32 %v969, %v977
        %980 = vset.pattern.permute.xlu0 7
        %981 = vperm.xlu0 %980, %v913
        %v982 = vpop.permute.xlu0 %981
        %v984 = vmul.f32 %v982, %v251
        %986 = vrot.lane.b32.xlu0 %v984, 16
        %v987 = vpop.permute.xlu0 %986
        %v989 = vadd.f32 %v979, %v987
        %991 = vrot.lane.b32.xlu0 %v437, 16
        %v992 = vpop.permute.xlu0 %991
        %995 = vrot.lane.b32.xlu0 %v529, 32
        %v996 = vpop.permute.xlu0 %995
        %999 = vrot.lane.b32.xlu0 %v621, 48
        %v1000 = vpop.permute.xlu0 %999
        %1003 = vrot.lane.b32.xlu0 %v713, 64
        %v1004 = vpop.permute.xlu0 %1003
        %1007 = vrot.lane.b32.xlu0 %v805, 80
        %v1008 = vpop.permute.xlu0 %1007
        %1011 = vrot.lane.b32.xlu0 %v897, 96
        %v1012 = vpop.permute.xlu0 %1011
        %1015 = vrot.lane.b32.xlu0 %v989, 112
        %v1016 = vpop.permute.xlu0 %1015
        %vm1018 = vcmask 130048
        %v1019 = vsel %vm1018, %v345, %v992
        %vm1020 = vcmask 261120
        %v1021 = vsel %vm1020, %v1019, %v996
        %vm1022 = vcmask 392192
        %v1023 = vsel %vm1022, %v1021, %v1000
        %vm1024 = vcmask 523264
        %v1025 = vsel %vm1024, %v1023, %v1004
        %vm1026 = vcmask 654336
        %v1027 = vsel %vm1026, %v1025, %v1008
        %vm1028 = vcmask 785408
        %v1029 = vsel %vm1028, %v1027, %v1012
        %vm1030 = vcmask 916480
        %v1031 = vsel %vm1030, %v1029, %v1016
        %1032 = vst [vmem:[%s214] sm:$0xff] %v1031
        %s1033 = sand.u32 %s125, 1
        %s1034 = scalar_lea.sflag [#allocation3], %s1033
        %s1035 = sand.u32 %s125, 1
        %s1036 = smul.addr %s1035, 8
        %s1037 = scalar_lea.vmem [#allocation2], %s1036
        // Predicated region
        $region37: #{tpu_custom_call.1} parent=35 // pred_check
          %p1038 = pneg %p135
        $region38: #{tpu_custom_call.1} parent=35 // pred_check_branch
          %1040 = sbr.rel (%p1038) target = $region40
        $region39: #{tpu_custom_call.1} parent=35 // pred_region
          %s1042 = ssub.s32 128, 128
          %1043 = vsyncadd %s1034, %s1042
          %s1044 = smul.addr %s18, 128
          %s1045 = scalar_lea.hbm %s4, %s1044
          %s1047 = sshll.u32 %s1037, 4
          %s1048 = int_to_ptr.vmem [resolvable:$true] %s1047
          %1050 = dma.vmem_to_hbm [thread:$0]  %s1048, 128, %s1045, %s1034
        $region40: #{tpu_custom_call.1} parent=35 // pred_fallthru
          _
      $region36: #{tpu_custom_call.1} parent=5 // pred_fallthru
        _
      %p1051 = scmp.le.s32.totalorder 2, %s13
      // Predicated region
      $region41: #{tpu_custom_call.1} parent=5 // pred_check
        %p1052 = pneg %p1051
      $region42: #{tpu_custom_call.1} parent=5 // pred_check_branch
        %1054 = sbr.rel (%p1052) target = $region44
      $region43: #{tpu_custom_call.1} parent=5 // pred_region
        %s1055 = ssub.s32 %s13, 2
        // Predicated region
        $region45: #{tpu_custom_call.1} parent=43 // pred_check
          %p1056 = pneg %p141
        $region46: #{tpu_custom_call.1} parent=43 // pred_check_branch
          %1058 = sbr.rel (%p1056) target = $region48
        $region47: #{tpu_custom_call.1} parent=43 // pred_region
          %s1059 = sand.u32 %s126, 1
          %s1060 = scalar_lea.sflag [#allocation3], %s1059
          %s1061 = sand.u32 %s126, 1
          %s1062 = smul.addr %s1061, 8
          %s1063 = scalar_lea.vmem [#allocation2], %s1062
          %1064 = dma.done %s1060, 128
        $region48: #{tpu_custom_call.1} parent=43 // pred_fallthru
          _
      $region44: #{tpu_custom_call.1} parent=5 // pred_fallthru
        _
    $region6: #{tpu_custom_call.1} parent=1 // loop_footer
      %s17 = sadd.s32 1, %s13
    $region7: #{tpu_custom_call.1} parent=1 // loop_footer_branch
      %12 = sbr.rel target = $region3
    $region8: #{tpu_custom_call.1} parent=1 // loop_exit
      _
    %1065 = vsyncpa [#allocation3], 1
    %s1066 = scalar_lea.sflag [#allocation3], 1
    %1067 = vsyncpa %s1066, 1

</llo_original>
